<compile_context>
chip_gen: v7x
topology: tpu7x:2x2x1
jax: 0.10.0
libtpu: 0.0.40
codegen_flags: <defaults>
</compile_context>

<pallas_src>
import functools

import jax
import jax.numpy as jnp
from jax.experimental import pallas as pl
from jax.experimental.pallas import tpu as pltpu


# Layer sizes from the nn.Sequential definition of ComplexNN.
_LAYER_DIMS = [100, 512, 512, 256, 128, 64, 1]
_LANE = 128


def _pad_up(n, m=_LANE):
    return ((n + m - 1) // m) * m


_PADDED_DIMS = [_pad_up(d) for d in _LAYER_DIMS]  # [128,512,512,256,128,128,128]


def _fused_mlp_kernel(*refs, n_layers):
    """refs = (x_ref, w0, b0, w1, b1, ..., w{L-1}, b{L-1}, o_ref).

    All refs are full VMEM blocks. Activations never leave VMEM; only the
    final (lane-padded) output is stored to HBM.
    """
    x_ref = refs[0]
    o_ref = refs[-1]
    wb = refs[1:-1]

    h = x_ref[...]  # f32 activations
    for i in range(n_layers):
        w = wb[2 * i][...]          # bf16 (pin, pout)
        b = wb[2 * i + 1][...]      # f32  (1, pout)
        acc = jnp.dot(h.astype(jnp.bfloat16), w,
                      preferred_element_type=jnp.float32)
        acc = acc + b
        if i < n_layers - 1:
            h = jnp.maximum(acc, 0.0)   # ReLU (Dropout is identity here)
        else:
            h = acc                     # final Linear(64, 1): no ReLU
    o_ref[...] = h.astype(o_ref.dtype)


def init_params(key):
    """Deterministic init matching nn.Linear (uniform +/- 1/sqrt(fan_in))."""
    params = []
    for i in range(len(_LAYER_DIMS) - 1):
        fan_in, fan_out = _LAYER_DIMS[i], _LAYER_DIMS[i + 1]
        key, kw, kb = jax.random.split(key, 3)
        bound = 1.0 / (fan_in ** 0.5)
        w = jax.random.uniform(kw, (fan_in, fan_out), jnp.float32, -bound, bound)
        b = jax.random.uniform(kb, (fan_out,), jnp.float32, -bound, bound)
        params.append((w, b))
    return params


def prepare_params(params):
    """Zero-pad feature dims up to multiples of 128 and cast weights to bf16."""
    padded = []
    for li, (w, b) in enumerate(params):
        pin, pout = _PADDED_DIMS[li], _PADDED_DIMS[li + 1]
        w_pad = jnp.pad(w, ((0, pin - w.shape[0]), (0, pout - w.shape[1])))
        b_pad = jnp.pad(b, (0, pout - b.shape[0])).reshape(1, pout)
        padded.append((w_pad.astype(jnp.bfloat16), b_pad.astype(jnp.float32)))
    return padded


def complex_nn_forward(x, padded_params):
    """Fused forward pass of ComplexNN via a single Pallas kernel.

    x: (B, 100) f32  ->  (B, 1) f32
    """
    B, F = x.shape
    n_layers = len(padded_params)
    in_pad = _PADDED_DIMS[0]
    out_pad = _PADDED_DIMS[-1]

    x_pad = jnp.pad(x, ((0, 0), (0, in_pad - F)))

    flat_args = [x_pad]
    in_specs = [pl.BlockSpec((B, in_pad), lambda i: (0, 0))]
    flops = 0
    bytes_accessed = x_pad.size * 4
    for li, (w_pad, b_pad) in enumerate(padded_params):
        pin, pout = w_pad.shape
        flat_args += [w_pad, b_pad]
        in_specs += [
            pl.BlockSpec((pin, pout), lambda i: (0, 0)),
            pl.BlockSpec((1, pout), lambda i: (0, 0)),
        ]
        flops += 2 * B * pin * pout
        bytes_accessed += w_pad.size * 2 + b_pad.size * 4
    bytes_accessed += B * out_pad * 4

    kernel = functools.partial(_fused_mlp_kernel, n_layers=n_layers)
    out_padded = pl.pallas_call(
        kernel,
        out_shape=jax.ShapeDtypeStruct((B, out_pad), jnp.float32),
        grid=(1,),
        in_specs=in_specs,
        out_specs=pl.BlockSpec((B, out_pad), lambda i: (0, 0)),
        compiler_params=pltpu.CompilerParams(
            dimension_semantics=("arbitrary",),
            vmem_limit_bytes=32 * 1024 * 1024,
        ),
        cost_estimate=pl.CostEstimate(
            flops=flops, transcendentals=0, bytes_accessed=bytes_accessed),
    )(*flat_args)

    # Only column 0 of the lane-padded output is the real Linear(64, 1) result.
    return out_padded[:, : _LAYER_DIMS[-1]]


def reference_forward(x, params):
    """Plain-JAX reference using the same bf16-weight / f32-accumulate math."""
    h = x
    n_layers = len(params)
    for idx, (w, b) in enumerate(params):
        h = jnp.dot(h.astype(jnp.bfloat16), w.astype(jnp.bfloat16),
                    preferred_element_type=jnp.float32) + b
        if idx < n_layers - 1:
            h = jnp.maximum(h, 0.0)
    return h


if __name__ == "__main__":
    key = jax.random.PRNGKey(0)
    key, kx = jax.random.split(key)

    batch = 8  # small deterministic example; kernel is weight-bound, so larger
               # batches (128+) would amortize the weight DMA for free.
    x = jax.random.normal(kx, (batch, 100), dtype=jnp.float32)

    params = init_params(key)
    padded_params = prepare_params(params)

    out = complex_nn_forward(x, padded_params)
    out = jax.block_until_ready(out)

    assert out.shape == (batch, 1), out.shape

    ref = jax.block_until_ready(reference_forward(x, params))
    assert jnp.allclose(out, ref, atol=5e-3, rtol=5e-3), "mismatch vs reference"

    print("KERNEL_OK")
</pallas_src>

<mosaic_0001>
module attributes {stable_mosaic.version = 11 : i64} {
  func.func @_fused_mlp_kernel(%arg0: i32, %arg1: memref<8x128xf32, #tpu.memory_space<vmem>>, %arg2: memref<128x512xbf16, #tpu.memory_space<vmem>>, %arg3: memref<1x512xf32, #tpu.memory_space<vmem>>, %arg4: memref<512x512xbf16, #tpu.memory_space<vmem>>, %arg5: memref<1x512xf32, #tpu.memory_space<vmem>>, %arg6: memref<512x256xbf16, #tpu.memory_space<vmem>>, %arg7: memref<1x256xf32, #tpu.memory_space<vmem>>, %arg8: memref<256x128xbf16, #tpu.memory_space<vmem>>, %arg9: memref<1x128xf32, #tpu.memory_space<vmem>>, %arg10: memref<128x128xbf16, #tpu.memory_space<vmem>>, %arg11: memref<1x128xf32, #tpu.memory_space<vmem>>, %arg12: memref<128x128xbf16, #tpu.memory_space<vmem>>, %arg13: memref<1x128xf32, #tpu.memory_space<vmem>>, %arg14: memref<8x128xf32, #tpu.memory_space<vmem>>) attributes {dimension_semantics = [#tpu.dimension_semantics<arbitrary>], iteration_bounds = array<i64: 1>, scalar_prefetch = 0 : i64, scratch_operands = 0 : i64, tpu.core_type = #tpu.core_type<tc>, window_params = [{pipeline_mode = #tpu.pipeline_mode<synchronous>, transform_indices = @transform_0, window_bounds = array<i64: 8, 128>}, {pipeline_mode = #tpu.pipeline_mode<synchronous>, transform_indices = @transform_1, window_bounds = array<i64: 128, 512>}, {pipeline_mode = #tpu.pipeline_mode<synchronous>, transform_indices = @transform_2, window_bounds = array<i64: 1, 512>}, {pipeline_mode = #tpu.pipeline_mode<synchronous>, transform_indices = @transform_3, window_bounds = array<i64: 512, 512>}, {pipeline_mode = #tpu.pipeline_mode<synchronous>, transform_indices = @transform_4, window_bounds = array<i64: 1, 512>}, {pipeline_mode = #tpu.pipeline_mode<synchronous>, transform_indices = @transform_5, window_bounds = array<i64: 512, 256>}, {pipeline_mode = #tpu.pipeline_mode<synchronous>, transform_indices = @transform_6, window_bounds = array<i64: 1, 256>}, {pipeline_mode = #tpu.pipeline_mode<synchronous>, transform_indices = @transform_7, window_bounds = array<i64: 256, 128>}, {pipeline_mode = #tpu.pipeline_mode<synchronous>, transform_indices = @transform_8, window_bounds = array<i64: 1, 128>}, {pipeline_mode = #tpu.pipeline_mode<synchronous>, transform_indices = @transform_9, window_bounds = array<i64: 128, 128>}, {pipeline_mode = #tpu.pipeline_mode<synchronous>, transform_indices = @transform_10, window_bounds = array<i64: 1, 128>}, {pipeline_mode = #tpu.pipeline_mode<synchronous>, transform_indices = @transform_11, window_bounds = array<i64: 128, 128>}, {pipeline_mode = #tpu.pipeline_mode<synchronous>, transform_indices = @transform_12, window_bounds = array<i64: 1, 128>}, {pipeline_mode = #tpu.pipeline_mode<synchronous>, transform_indices = @transform_13, window_bounds = array<i64: 8, 128>}]} {
    %c0 = arith.constant 0 : index
    %c0_0 = arith.constant 0 : index
    %0 = vector.load %arg1[%c0, %c0_0] : memref<8x128xf32, #tpu.memory_space<vmem>>, vector<8x128xf32>
    %c0_1 = arith.constant 0 : index
    %c0_2 = arith.constant 0 : index
    %1 = vector.load %arg2[%c0_1, %c0_2] : memref<128x512xbf16, #tpu.memory_space<vmem>>, vector<128x512xbf16>
    %c0_3 = arith.constant 0 : index
    %c0_4 = arith.constant 0 : index
    %2 = vector.load %arg3[%c0_3, %c0_4] : memref<1x512xf32, #tpu.memory_space<vmem>>, vector<1x512xf32>
    %3 = arith.truncf %0 : vector<8x128xf32> to vector<8x128xbf16>
    %cst = arith.constant dense<0.000000e+00> : vector<8x512xf32>
    %4 = tpu.matmul %3, %1, %cst {dimension_numbers = #tpu.dot_dimension_numbers<[1], [0], [0], [1], [0, 0, 1, 1], [], []>} : vector<8x128xbf16>, vector<128x512xbf16>, vector<8x512xf32> -> vector<8x512xf32>
    %5 = vector.broadcast %2 : vector<1x512xf32> to vector<8x512xf32>
    %6 = arith.addf %4, %5 : vector<8x512xf32>
    %cst_5 = arith.constant 0.000000e+00 : f32
    %7 = vector.broadcast %cst_5 : f32 to vector<8x512xf32>
    %8 = arith.maximumf %6, %7 : vector<8x512xf32>
    %c0_6 = arith.constant 0 : index
    %c0_7 = arith.constant 0 : index
    %9 = vector.load %arg4[%c0_6, %c0_7] : memref<512x512xbf16, #tpu.memory_space<vmem>>, vector<512x512xbf16>
    %c0_8 = arith.constant 0 : index
    %c0_9 = arith.constant 0 : index
    %10 = vector.load %arg5[%c0_8, %c0_9] : memref<1x512xf32, #tpu.memory_space<vmem>>, vector<1x512xf32>
    %11 = arith.truncf %8 : vector<8x512xf32> to vector<8x512xbf16>
    %cst_10 = arith.constant dense<0.000000e+00> : vector<8x512xf32>
    %12 = tpu.matmul %11, %9, %cst_10 {dimension_numbers = #tpu.dot_dimension_numbers<[1], [0], [0], [1], [0, 0, 1, 1], [], []>} : vector<8x512xbf16>, vector<512x512xbf16>, vector<8x512xf32> -> vector<8x512xf32>
    %13 = vector.broadcast %10 : vector<1x512xf32> to vector<8x512xf32>
    %14 = arith.addf %12, %13 : vector<8x512xf32>
    %cst_11 = arith.constant 0.000000e+00 : f32
    %15 = vector.broadcast %cst_11 : f32 to vector<8x512xf32>
    %16 = arith.maximumf %14, %15 : vector<8x512xf32>
    %c0_12 = arith.constant 0 : index
    %c0_13 = arith.constant 0 : index
    %17 = vector.load %arg6[%c0_12, %c0_13] : memref<512x256xbf16, #tpu.memory_space<vmem>>, vector<512x256xbf16>
    %c0_14 = arith.constant 0 : index
    %c0_15 = arith.constant 0 : index
    %18 = vector.load %arg7[%c0_14, %c0_15] : memref<1x256xf32, #tpu.memory_space<vmem>>, vector<1x256xf32>
    %19 = arith.truncf %16 : vector<8x512xf32> to vector<8x512xbf16>
    %cst_16 = arith.constant dense<0.000000e+00> : vector<8x256xf32>
    %20 = tpu.matmul %19, %17, %cst_16 {dimension_numbers = #tpu.dot_dimension_numbers<[1], [0], [0], [1], [0, 0, 1, 1], [], []>} : vector<8x512xbf16>, vector<512x256xbf16>, vector<8x256xf32> -> vector<8x256xf32>
    %21 = vector.broadcast %18 : vector<1x256xf32> to vector<8x256xf32>
    %22 = arith.addf %20, %21 : vector<8x256xf32>
    %cst_17 = arith.constant 0.000000e+00 : f32
    %23 = vector.broadcast %cst_17 : f32 to vector<8x256xf32>
    %24 = arith.maximumf %22, %23 : vector<8x256xf32>
    %c0_18 = arith.constant 0 : index
    %c0_19 = arith.constant 0 : index
    %25 = vector.load %arg8[%c0_18, %c0_19] : memref<256x128xbf16, #tpu.memory_space<vmem>>, vector<256x128xbf16>
    %c0_20 = arith.constant 0 : index
    %c0_21 = arith.constant 0 : index
    %26 = vector.load %arg9[%c0_20, %c0_21] : memref<1x128xf32, #tpu.memory_space<vmem>>, vector<1x128xf32>
    %27 = arith.truncf %24 : vector<8x256xf32> to vector<8x256xbf16>
    %cst_22 = arith.constant dense<0.000000e+00> : vector<8x128xf32>
    %28 = tpu.matmul %27, %25, %cst_22 {dimension_numbers = #tpu.dot_dimension_numbers<[1], [0], [0], [1], [0, 0, 1, 1], [], []>} : vector<8x256xbf16>, vector<256x128xbf16>, vector<8x128xf32> -> vector<8x128xf32>
    %29 = vector.broadcast %26 : vector<1x128xf32> to vector<8x128xf32>
    %30 = arith.addf %28, %29 : vector<8x128xf32>
    %cst_23 = arith.constant 0.000000e+00 : f32
    %31 = vector.broadcast %cst_23 : f32 to vector<8x128xf32>
    %32 = arith.maximumf %30, %31 : vector<8x128xf32>
    %c0_24 = arith.constant 0 : index
    %c0_25 = arith.constant 0 : index
    %33 = vector.load %arg10[%c0_24, %c0_25] : memref<128x128xbf16, #tpu.memory_space<vmem>>, vector<128x128xbf16>
    %c0_26 = arith.constant 0 : index
    %c0_27 = arith.constant 0 : index
    %34 = vector.load %arg11[%c0_26, %c0_27] : memref<1x128xf32, #tpu.memory_space<vmem>>, vector<1x128xf32>
    %35 = arith.truncf %32 : vector<8x128xf32> to vector<8x128xbf16>
    %cst_28 = arith.constant dense<0.000000e+00> : vector<8x128xf32>
    %36 = tpu.matmul %35, %33, %cst_28 {dimension_numbers = #tpu.dot_dimension_numbers<[1], [0], [0], [1], [0, 0, 1, 1], [], []>} : vector<8x128xbf16>, vector<128x128xbf16>, vector<8x128xf32> -> vector<8x128xf32>
    %37 = vector.broadcast %34 : vector<1x128xf32> to vector<8x128xf32>
    %38 = arith.addf %36, %37 : vector<8x128xf32>
    %cst_29 = arith.constant 0.000000e+00 : f32
    %39 = vector.broadcast %cst_29 : f32 to vector<8x128xf32>
    %40 = arith.maximumf %38, %39 : vector<8x128xf32>
    %c0_30 = arith.constant 0 : index
    %c0_31 = arith.constant 0 : index
    %41 = vector.load %arg12[%c0_30, %c0_31] : memref<128x128xbf16, #tpu.memory_space<vmem>>, vector<128x128xbf16>
    %c0_32 = arith.constant 0 : index
    %c0_33 = arith.constant 0 : index
    %42 = vector.load %arg13[%c0_32, %c0_33] : memref<1x128xf32, #tpu.memory_space<vmem>>, vector<1x128xf32>
    %43 = arith.truncf %40 : vector<8x128xf32> to vector<8x128xbf16>
    %cst_34 = arith.constant dense<0.000000e+00> : vector<8x128xf32>
    %44 = tpu.matmul %43, %41, %cst_34 {dimension_numbers = #tpu.dot_dimension_numbers<[1], [0], [0], [1], [0, 0, 1, 1], [], []>} : vector<8x128xbf16>, vector<128x128xbf16>, vector<8x128xf32> -> vector<8x128xf32>
    %45 = vector.broadcast %42 : vector<1x128xf32> to vector<8x128xf32>
    %46 = arith.addf %44, %45 : vector<8x128xf32>
    %c0_35 = arith.constant 0 : index
    %c0_36 = arith.constant 0 : index
    %47 = vector.load %arg14[%c0_35, %c0_36] : memref<8x128xf32, #tpu.memory_space<vmem>>, vector<8x128xf32>
    tpu.vector_store %arg14[%c0_35, %c0_36], %46 {strides = array<i32>} : memref<8x128xf32, #tpu.memory_space<vmem>>, vector<8x128xf32>,
    return
  }
  func.func @transform_0(%arg0: i32) -> (i32, i32) {
    %c0_i32 = arith.constant 0 : i32
    %c0_i32_0 = arith.constant 0 : i32
    %c0_i32_1 = arith.constant 0 : i32
    return %c0_i32, %c0_i32_0 : i32, i32
  }
  func.func @transform_1(%arg0: i32) -> (i32, i32) {
    %c0_i32 = arith.constant 0 : i32
    %c0_i32_0 = arith.constant 0 : i32
    %c0_i32_1 = arith.constant 0 : i32
    return %c0_i32, %c0_i32_0 : i32, i32
  }
  func.func @transform_2(%arg0: i32) -> (i32, i32) {
    %c0_i32 = arith.constant 0 : i32
    %c0_i32_0 = arith.constant 0 : i32
    %c0_i32_1 = arith.constant 0 : i32
    return %c0_i32, %c0_i32_0 : i32, i32
  }
  func.func @transform_3(%arg0: i32) -> (i32, i32) {
    %c0_i32 = arith.constant 0 : i32
    %c0_i32_0 = arith.constant 0 : i32
    %c0_i32_1 = arith.constant 0 : i32
    return %c0_i32, %c0_i32_0 : i32, i32
  }
  func.func @transform_4(%arg0: i32) -> (i32, i32) {
    %c0_i32 = arith.constant 0 : i32
    %c0_i32_0 = arith.constant 0 : i32
    %c0_i32_1 = arith.constant 0 : i32
    return %c0_i32, %c0_i32_0 : i32, i32
  }
  func.func @transform_5(%arg0: i32) -> (i32, i32) {
    %c0_i32 = arith.constant 0 : i32
    %c0_i32_0 = arith.constant 0 : i32
    %c0_i32_1 = arith.constant 0 : i32
    return %c0_i32, %c0_i32_0 : i32, i32
  }
  func.func @transform_6(%arg0: i32) -> (i32, i32) {
    %c0_i32 = arith.constant 0 : i32
    %c0_i32_0 = arith.constant 0 : i32
    %c0_i32_1 = arith.constant 0 : i32
    return %c0_i32, %c0_i32_0 : i32, i32
  }
  func.func @transform_7(%arg0: i32) -> (i32, i32) {
    %c0_i32 = arith.constant 0 : i32
    %c0_i32_0 = arith.constant 0 : i32
    %c0_i32_1 = arith.constant 0 : i32
    return %c0_i32, %c0_i32_0 : i32, i32
  }
  func.func @transform_8(%arg0: i32) -> (i32, i32) {
    %c0_i32 = arith.constant 0 : i32
    %c0_i32_0 = arith.constant 0 : i32
    %c0_i32_1 = arith.constant 0 : i32
    return %c0_i32, %c0_i32_0 : i32, i32
  }
  func.func @transform_9(%arg0: i32) -> (i32, i32) {
    %c0_i32 = arith.constant 0 : i32
    %c0_i32_0 = arith.constant 0 : i32
    %c0_i32_1 = arith.constant 0 : i32
    return %c0_i32, %c0_i32_0 : i32, i32
  }
  func.func @transform_10(%arg0: i32) -> (i32, i32) {
    %c0_i32 = arith.constant 0 : i32
    %c0_i32_0 = arith.constant 0 : i32
    %c0_i32_1 = arith.constant 0 : i32
    return %c0_i32, %c0_i32_0 : i32, i32
  }
  func.func @transform_11(%arg0: i32) -> (i32, i32) {
    %c0_i32 = arith.constant 0 : i32
    %c0_i32_0 = arith.constant 0 : i32
    %c0_i32_1 = arith.constant 0 : i32
    return %c0_i32, %c0_i32_0 : i32, i32
  }
  func.func @transform_12(%arg0: i32) -> (i32, i32) {
    %c0_i32 = arith.constant 0 : i32
    %c0_i32_0 = arith.constant 0 : i32
    %c0_i32_1 = arith.constant 0 : i32
    return %c0_i32, %c0_i32_0 : i32, i32
  }
  func.func @transform_13(%arg0: i32) -> (i32, i32) {
    %c0_i32 = arith.constant 0 : i32
    %c0_i32_0 = arith.constant 0 : i32
    %c0_i32_1 = arith.constant 0 : i32
    return %c0_i32, %c0_i32_0 : i32, i32
  }
}

</mosaic_0001>

<llo_original>
// kernel: tpu_custom_call.1
$region0: #{tpu_custom_call.1}
  #allocation0 [shape = 'u32[]', space=smem, size = 0x4, offset = 0x4, fixed_abs, tag = 'smem constant byte address 0x4 - core index']
  #allocation1 [shape = 'u32[144,128]{1,0:T(1,128)}', space=vmem, size = 0x12000, scoped, tag = 'internal scratch']
  %s0 = inlined_call_operand.hbm [shape: f32[8,128], index: 0, kind: input, shape index: {}]
  %s1 = inlined_call_operand.hbm [shape: bf16[128,512], index: 1, kind: input, shape index: {}]
  %s2 = inlined_call_operand.vmem [shape: f32[1,512], index: 2, kind: input, shape index: {}]
  %s3 = inlined_call_operand.hbm [shape: bf16[512,512], index: 3, kind: input, shape index: {}]
  %s4 = inlined_call_operand.vmem [shape: f32[1,512], index: 4, kind: input, shape index: {}]
  %s5 = inlined_call_operand.hbm [shape: bf16[512,256], index: 5, kind: input, shape index: {}]
  %s6 = inlined_call_operand.vmem [shape: f32[1,256], index: 6, kind: input, shape index: {}]
  %s7 = inlined_call_operand.hbm [shape: bf16[256,128], index: 7, kind: input, shape index: {}]
  %s8 = inlined_call_operand.vmem [shape: f32[1,128], index: 8, kind: input, shape index: {}]
  %s9 = inlined_call_operand.hbm [shape: bf16[128,128], index: 9, kind: input, shape index: {}]
  %s10 = inlined_call_operand.vmem [shape: f32[1,128], index: 10, kind: input, shape index: {}]
  %s11 = inlined_call_operand.hbm [shape: bf16[128,128], index: 11, kind: input, shape index: {}]
  %s12 = inlined_call_operand.vmem [shape: f32[1,128], index: 12, kind: input, shape index: {}]
  %s13 = inlined_call_operand.hbm [shape: f32[8,128], index: 13, kind: output, shape index: {}]
  %s14 = sld [smem:[#allocation0]]
  $region90: #{tpu_custom_call.1} parent=0
    _
  %s16 = ssub.s32 1, %s14
  %s17 = scalar_select 0, %s16, %s14
  $region1: #{tpu_custom_call.1} parent=0
    #allocation2 [shape = 'u8[4096]{0}', space=vmem, size = 0x1000, scoped, tag = 'input window, operand 0, single buffered']
    #allocation3 [shape = 's32[1]{0}', space=sflag, size = 0x4, scoped, tag = 'scoped memory for tpu_custom_call.1']
    #allocation4 [shape = 's32[1]{0}', space=sflag, size = 0x4, scoped, tag = 'scoped memory for tpu_custom_call.1']
    #allocation5 [shape = 'u8[131072]{0}', space=vmem, size = 0x20000, scoped, tag = 'input window, operand 1, single buffered']
    #allocation6 [shape = 's32[1]{0}', space=sflag, size = 0x4, scoped, tag = 'scoped memory for tpu_custom_call.1']
    #allocation7 [shape = 'u8[524288]{0}', space=vmem, size = 0x80000, scoped, tag = 'input window, operand 3, single buffered']
    #allocation8 [shape = 'u8[262144]{0}', space=vmem, size = 0x40000, scoped, tag = 'input window, operand 5, single buffered']
    #allocation9 [shape = 's32[1]{0}', space=sflag, size = 0x4, scoped, tag = 'scoped memory for tpu_custom_call.1']
    #allocation10 [shape = 'u8[65536]{0}', space=vmem, size = 0x10000, scoped, tag = 'input window, operand 7, single buffered']
    #allocation11 [shape = 'u8[32768]{0}', space=vmem, size = 0x8000, scoped, tag = 'input window, operand 9, single buffered']
    #allocation12 [shape = 's32[1]{0}', space=sflag, size = 0x4, scoped, tag = 'scoped memory for tpu_custom_call.1']
    #allocation13 [shape = 'u8[32768]{0}', space=vmem, size = 0x8000, scoped, tag = 'input window, operand 11, single buffered']
    #allocation14 [shape = 'u8[4096]{0}', space=vmem, size = 0x1000, scoped, tag = 'output window, operand 0, single buffered']
    %18 = vsyncpa [#allocation3], 0
    %19 = vsyncpa [#allocation6], 0
    %20 = vsyncpa [#allocation9], 0
    %21 = vsyncpa [#allocation12], 0
    %22 = vsyncpa [#allocation4], 0
    // Predicated region
    $region2: #{tpu_custom_call.1} parent=1 // pred_check
      _
    $region3: #{tpu_custom_call.1} parent=1 // pred_check_branch
      %24 = sbr.rel (0) target = $region5
    $region4: #{tpu_custom_call.1} parent=1 // pred_region
      %s26 = ssub.s32 128, 128
      %27 = vsyncadd [#allocation3], %s26
      %s29 = sshll.u32 [#allocation2], 4
      %s30 = int_to_ptr.vmem [resolvable:$true] %s29
      %32 = dma.hbm_to_vmem [thread:$0]  %s0, 128, %s30, [#allocation3]
    $region5: #{tpu_custom_call.1} parent=1 // pred_fallthru
      _
    // Predicated region
    $region6: #{tpu_custom_call.1} parent=1 // pred_check
      _
    $region7: #{tpu_custom_call.1} parent=1 // pred_check_branch
      %34 = sbr.rel (0) target = $region9
    $region8: #{tpu_custom_call.1} parent=1 // pred_region
      %s36 = ssub.s32 4096, 4096
      %37 = vsyncadd [#allocation6], %s36
      %s38 = sshll.u32 [#allocation5], 4
      %s39 = int_to_ptr.vmem [resolvable:$true] %s38
      %44 = dma.hbm_to_vmem [thread:$0]  %s1, 4096, %s39, [#allocation6], 256, 256, 16
    $region9: #{tpu_custom_call.1} parent=1 // pred_fallthru
      _
    // Predicated region
    $region10: #{tpu_custom_call.1} parent=1 // pred_check
      _
    $region11: #{tpu_custom_call.1} parent=1 // pred_check_branch
      %46 = sbr.rel (0) target = $region13
    $region12: #{tpu_custom_call.1} parent=1 // pred_region
      _
    $region13: #{tpu_custom_call.1} parent=1 // pred_fallthru
      _
    // Predicated region
    $region14: #{tpu_custom_call.1} parent=1 // pred_check
      _
    $region15: #{tpu_custom_call.1} parent=1 // pred_check_branch
      %48 = sbr.rel (0) target = $region17
    $region16: #{tpu_custom_call.1} parent=1 // pred_region
      %s50 = ssub.s32 16384, 16384
      %51 = vsyncadd [#allocation6], %s50
      %s52 = sshll.u32 [#allocation7], 4
      %s53 = int_to_ptr.vmem [resolvable:$true] %s52
      %58 = dma.hbm_to_vmem [thread:$0]  %s3, 16384, %s53, [#allocation6], 256, 256, 16
    $region17: #{tpu_custom_call.1} parent=1 // pred_fallthru
      _
    // Predicated region
    $region18: #{tpu_custom_call.1} parent=1 // pred_check
      _
    $region19: #{tpu_custom_call.1} parent=1 // pred_check_branch
      %60 = sbr.rel (0) target = $region21
    $region20: #{tpu_custom_call.1} parent=1 // pred_region
      _
    $region21: #{tpu_custom_call.1} parent=1 // pred_fallthru
      _
    // Predicated region
    $region22: #{tpu_custom_call.1} parent=1 // pred_check
      _
    $region23: #{tpu_custom_call.1} parent=1 // pred_check_branch
      %62 = sbr.rel (0) target = $region25
    $region24: #{tpu_custom_call.1} parent=1 // pred_region
      %s64 = ssub.s32 8192, 8192
      %65 = vsyncadd [#allocation9], %s64
      %s66 = sshll.u32 [#allocation8], 4
      %s67 = int_to_ptr.vmem [resolvable:$true] %s66
      %72 = dma.hbm_to_vmem [thread:$0]  %s5, 8192, %s67, [#allocation9], 128, 128, 8
    $region25: #{tpu_custom_call.1} parent=1 // pred_fallthru
      _
    // Predicated region
    $region26: #{tpu_custom_call.1} parent=1 // pred_check
      _
    $region27: #{tpu_custom_call.1} parent=1 // pred_check_branch
      %74 = sbr.rel (0) target = $region29
    $region28: #{tpu_custom_call.1} parent=1 // pred_region
      _
    $region29: #{tpu_custom_call.1} parent=1 // pred_fallthru
      _
    // Predicated region
    $region30: #{tpu_custom_call.1} parent=1 // pred_check
      _
    $region31: #{tpu_custom_call.1} parent=1 // pred_check_branch
      %76 = sbr.rel (0) target = $region33
    $region32: #{tpu_custom_call.1} parent=1 // pred_region
      %s78 = ssub.s32 2048, 2048
      %79 = vsyncadd [#allocation9], %s78
      %s80 = sshll.u32 [#allocation10], 4
      %s81 = int_to_ptr.vmem [resolvable:$true] %s80
      %86 = dma.hbm_to_vmem [thread:$0]  %s7, 2048, %s81, [#allocation9], 64, 64, 4
    $region33: #{tpu_custom_call.1} parent=1 // pred_fallthru
      _
    // Predicated region
    $region34: #{tpu_custom_call.1} parent=1 // pred_check
      _
    $region35: #{tpu_custom_call.1} parent=1 // pred_check_branch
      %88 = sbr.rel (0) target = $region37
    $region36: #{tpu_custom_call.1} parent=1 // pred_region
      _
    $region37: #{tpu_custom_call.1} parent=1 // pred_fallthru
      _
    // Predicated region
    $region38: #{tpu_custom_call.1} parent=1 // pred_check
      _
    $region39: #{tpu_custom_call.1} parent=1 // pred_check_branch
      %90 = sbr.rel (0) target = $region41
    $region40: #{tpu_custom_call.1} parent=1 // pred_region
      %s92 = ssub.s32 1024, 1024
      %93 = vsyncadd [#allocation12], %s92
      %s94 = sshll.u32 [#allocation11], 4
      %s95 = int_to_ptr.vmem [resolvable:$true] %s94
      %100 = dma.hbm_to_vmem [thread:$0]  %s9, 1024, %s95, [#allocation12], 64, 64, 4
    $region41: #{tpu_custom_call.1} parent=1 // pred_fallthru
      _
    // Predicated region
    $region42: #{tpu_custom_call.1} parent=1 // pred_check
      _
    $region43: #{tpu_custom_call.1} parent=1 // pred_check_branch
      %102 = sbr.rel (0) target = $region45
    $region44: #{tpu_custom_call.1} parent=1 // pred_region
      _
    $region45: #{tpu_custom_call.1} parent=1 // pred_fallthru
      _
    // Predicated region
    $region46: #{tpu_custom_call.1} parent=1 // pred_check
      _
    $region47: #{tpu_custom_call.1} parent=1 // pred_check_branch
      %104 = sbr.rel (0) target = $region49
    $region48: #{tpu_custom_call.1} parent=1 // pred_region
      %s106 = ssub.s32 1024, 1024
      %107 = vsyncadd [#allocation12], %s106
      %s108 = sshll.u32 [#allocation13], 4
      %s109 = int_to_ptr.vmem [resolvable:$true] %s108
      %114 = dma.hbm_to_vmem [thread:$0]  %s11, 1024, %s109, [#allocation12], 64, 64, 4
    $region49: #{tpu_custom_call.1} parent=1 // pred_fallthru
      _
    // Predicated region
    $region50: #{tpu_custom_call.1} parent=1 // pred_check
      _
    $region51: #{tpu_custom_call.1} parent=1 // pred_check_branch
      %116 = sbr.rel (0) target = $region53
    $region52: #{tpu_custom_call.1} parent=1 // pred_region
      _
    $region53: #{tpu_custom_call.1} parent=1 // pred_fallthru
      _
    // Predicated region
    $region54: #{tpu_custom_call.1} parent=1 // pred_check
      _
    $region55: #{tpu_custom_call.1} parent=1 // pred_check_branch
      %118 = sbr.rel (0) target = $region57
    $region56: #{tpu_custom_call.1} parent=1 // pred_region
      %119 = dma.done [#allocation3], 128
    $region57: #{tpu_custom_call.1} parent=1 // pred_fallthru
      _
    // Predicated region
    $region58: #{tpu_custom_call.1} parent=1 // pred_check
      _
    $region59: #{tpu_custom_call.1} parent=1 // pred_check_branch
      %121 = sbr.rel (0) target = $region61
    $region60: #{tpu_custom_call.1} parent=1 // pred_region
      %122 = dma.done [#allocation6], 4096
    $region61: #{tpu_custom_call.1} parent=1 // pred_fallthru
      _
    // Predicated region
    $region62: #{tpu_custom_call.1} parent=1 // pred_check
      _
    $region63: #{tpu_custom_call.1} parent=1 // pred_check_branch
      %124 = sbr.rel (0) target = $region65
    $region64: #{tpu_custom_call.1} parent=1 // pred_region
      %125 = dma.done [#allocation6], 16384
    $region65: #{tpu_custom_call.1} parent=1 // pred_fallthru
      _
    // Predicated region
    $region66: #{tpu_custom_call.1} parent=1 // pred_check
      _
    $region67: #{tpu_custom_call.1} parent=1 // pred_check_branch
      %127 = sbr.rel (0) target = $region69
    $region68: #{tpu_custom_call.1} parent=1 // pred_region
      %128 = dma.done [#allocation9], 8192
    $region69: #{tpu_custom_call.1} parent=1 // pred_fallthru
      _
    // Predicated region
    $region70: #{tpu_custom_call.1} parent=1 // pred_check
      _
    $region71: #{tpu_custom_call.1} parent=1 // pred_check_branch
      %130 = sbr.rel (0) target = $region73
    $region72: #{tpu_custom_call.1} parent=1 // pred_region
      %131 = dma.done [#allocation9], 2048
    $region73: #{tpu_custom_call.1} parent=1 // pred_fallthru
      _
    // Predicated region
    $region74: #{tpu_custom_call.1} parent=1 // pred_check
      _
    $region75: #{tpu_custom_call.1} parent=1 // pred_check_branch
      %133 = sbr.rel (0) target = $region77
    $region76: #{tpu_custom_call.1} parent=1 // pred_region
      %134 = dma.done [#allocation12], 1024
    $region77: #{tpu_custom_call.1} parent=1 // pred_fallthru
      _
    // Predicated region
    $region78: #{tpu_custom_call.1} parent=1 // pred_check
      _
    $region79: #{tpu_custom_call.1} parent=1 // pred_check_branch
      %136 = sbr.rel (0) target = $region81
    $region80: #{tpu_custom_call.1} parent=1 // pred_region
      %137 = dma.done [#allocation12], 1024
    $region81: #{tpu_custom_call.1} parent=1 // pred_fallthru
      _
    %v139 = vld [vmem:[#allocation2] sm:$0xff]
    %v140 = vld [vmem:[#allocation5] sm:$0xff]
    %v141 = vld [vmem:[#allocation5 + $0x8] sm:$0xff]
    %v142 = vld [vmem:[#allocation5 + $0x10] sm:$0xff]
    %v143 = vld [vmem:[#allocation5 + $0x18] sm:$0xff]
    %v144 = vld [vmem:[#allocation5 + $0x20] sm:$0xff]
    %v145 = vld [vmem:[#allocation5 + $0x28] sm:$0xff]
    %v146 = vld [vmem:[#allocation5 + $0x30] sm:$0xff]
    %v147 = vld [vmem:[#allocation5 + $0x38] sm:$0xff]
    %v148 = vld [vmem:[#allocation5 + $0x40] sm:$0xff]
    %v149 = vld [vmem:[#allocation5 + $0x48] sm:$0xff]
    %v150 = vld [vmem:[#allocation5 + $0x50] sm:$0xff]
    %v151 = vld [vmem:[#allocation5 + $0x58] sm:$0xff]
    %v152 = vld [vmem:[#allocation5 + $0x60] sm:$0xff]
    %v153 = vld [vmem:[#allocation5 + $0x68] sm:$0xff]
    %v154 = vld [vmem:[#allocation5 + $0x70] sm:$0xff]
    %v155 = vld [vmem:[#allocation5 + $0x78] sm:$0xff]
    %v156 = vld [vmem:[#allocation5 + $0x80] sm:$0xff]
    %v157 = vld [vmem:[#allocation5 + $0x88] sm:$0xff]
    %v158 = vld [vmem:[#allocation5 + $0x90] sm:$0xff]
    %v159 = vld [vmem:[#allocation5 + $0x98] sm:$0xff]
    %v160 = vld [vmem:[#allocation5 + $0xa0] sm:$0xff]
    %v161 = vld [vmem:[#allocation5 + $0xa8] sm:$0xff]
    %v162 = vld [vmem:[#allocation5 + $0xb0] sm:$0xff]
    %v163 = vld [vmem:[#allocation5 + $0xb8] sm:$0xff]
    %v164 = vld [vmem:[#allocation5 + $0xc0] sm:$0xff]
    %v165 = vld [vmem:[#allocation5 + $0xc8] sm:$0xff]
    %v166 = vld [vmem:[#allocation5 + $0xd0] sm:$0xff]
    %v167 = vld [vmem:[#allocation5 + $0xd8] sm:$0xff]
    %v168 = vld [vmem:[#allocation5 + $0xe0] sm:$0xff]
    %v169 = vld [vmem:[#allocation5 + $0xe8] sm:$0xff]
    %v170 = vld [vmem:[#allocation5 + $0xf0] sm:$0xff]
    %v171 = vld [vmem:[#allocation5 + $0xf8] sm:$0xff]
    %v172 = vld [vmem:[%s2] sm:$0xf]
    %v173 = vpack.c.bf16 %v139, %v139
    %v175 = vlaneseq
    %v176 = vshrl.u32 %v175, 7
    %v177 = vsub.s32 0, %v176
    %v178 = vrot.slane %v172, %v177
    %v179 = vlaneseq
    %v180 = vshrl.u32 %v179, 7
    %v181 = vsub.s32 1, %v180
    %v182 = vrot.slane %v172, %v181
    %v183 = vlaneseq
    %v184 = vshrl.u32 %v183, 7
    %v185 = vsub.s32 2, %v184
    %v186 = vrot.slane %v172, %v185
    %v187 = vlaneseq
    %v188 = vshrl.u32 %v187, 7
    %v189 = vsub.s32 3, %v188
    %v190 = vrot.slane %v172, %v189
    %v227 = vunpack.c.l.b16 %v140
    %v228 = vunpack.c.h.b16 %v140
    %v229 = vunpack.c.l.b16 %v141
    %v230 = vunpack.c.h.b16 %v141
    %v231 = vunpack.c.l.b16 %v142
    %v232 = vunpack.c.h.b16 %v142
    %v233 = vunpack.c.l.b16 %v143
    %v234 = vunpack.c.h.b16 %v143
    %v235 = vunpack.c.l.b16 %v144
    %v236 = vunpack.c.h.b16 %v144
    %v237 = vunpack.c.l.b16 %v145
    %v238 = vunpack.c.h.b16 %v145
    %v239 = vunpack.c.l.b16 %v146
    %v240 = vunpack.c.h.b16 %v146
    %v241 = vunpack.c.l.b16 %v147
    %v242 = vunpack.c.h.b16 %v147
    %v243 = vunpack.c.l.b16 %v148
    %v244 = vunpack.c.h.b16 %v148
    %v245 = vunpack.c.l.b16 %v149
    %v246 = vunpack.c.h.b16 %v149
    %v247 = vunpack.c.l.b16 %v150
    %v248 = vunpack.c.h.b16 %v150
    %v249 = vunpack.c.l.b16 %v151
    %v250 = vunpack.c.h.b16 %v151
    %v251 = vunpack.c.l.b16 %v152
    %v252 = vunpack.c.h.b16 %v152
    %v253 = vunpack.c.l.b16 %v153
    %v254 = vunpack.c.h.b16 %v153
    %v255 = vunpack.c.l.b16 %v154
    %v256 = vunpack.c.h.b16 %v154
    %v257 = vunpack.c.l.b16 %v155
    %v258 = vunpack.c.h.b16 %v155
    %v259 = vunpack.c.l.b16 %v156
    %v260 = vunpack.c.h.b16 %v156
    %v261 = vunpack.c.l.b16 %v157
    %v262 = vunpack.c.h.b16 %v157
    %v263 = vunpack.c.l.b16 %v158
    %v264 = vunpack.c.h.b16 %v158
    %v265 = vunpack.c.l.b16 %v159
    %v266 = vunpack.c.h.b16 %v159
    %v267 = vunpack.c.l.b16 %v160
    %v268 = vunpack.c.h.b16 %v160
    %v269 = vunpack.c.l.b16 %v161
    %v270 = vunpack.c.h.b16 %v161
    %v271 = vunpack.c.l.b16 %v162
    %v272 = vunpack.c.h.b16 %v162
    %v273 = vunpack.c.l.b16 %v163
    %v274 = vunpack.c.h.b16 %v163
    %v275 = vunpack.c.l.b16 %v164
    %v276 = vunpack.c.h.b16 %v164
    %v277 = vunpack.c.l.b16 %v165
    %v278 = vunpack.c.h.b16 %v165
    %v279 = vunpack.c.l.b16 %v166
    %v280 = vunpack.c.h.b16 %v166
    %v281 = vunpack.c.l.b16 %v167
    %v282 = vunpack.c.h.b16 %v167
    %v283 = vunpack.c.l.b16 %v168
    %v284 = vunpack.c.h.b16 %v168
    %v285 = vunpack.c.l.b16 %v169
    %v286 = vunpack.c.h.b16 %v169
    %v287 = vunpack.c.l.b16 %v170
    %v288 = vunpack.c.h.b16 %v170
    %v289 = vunpack.c.l.b16 %v171
    %v290 = vunpack.c.h.b16 %v171
    %v291 = vpack.c.b16 %v231, %v227
    %v292 = vpack.c.b16 %v232, %v228
    %v293 = vpack.c.b16 %v233, %v229
    %v294 = vpack.c.b16 %v234, %v230
    %v295 = vpack.c.b16 %v239, %v235
    %v296 = vpack.c.b16 %v240, %v236
    %v297 = vpack.c.b16 %v241, %v237
    %v298 = vpack.c.b16 %v242, %v238
    %v299 = vpack.c.b16 %v247, %v243
    %v300 = vpack.c.b16 %v248, %v244
    %v301 = vpack.c.b16 %v249, %v245
    %v302 = vpack.c.b16 %v250, %v246
    %v303 = vpack.c.b16 %v255, %v251
    %v304 = vpack.c.b16 %v256, %v252
    %v305 = vpack.c.b16 %v257, %v253
    %v306 = vpack.c.b16 %v258, %v254
    %v307 = vpack.c.b16 %v263, %v259
    %v308 = vpack.c.b16 %v264, %v260
    %v309 = vpack.c.b16 %v265, %v261
    %v310 = vpack.c.b16 %v266, %v262
    %v311 = vpack.c.b16 %v271, %v267
    %v312 = vpack.c.b16 %v272, %v268
    %v313 = vpack.c.b16 %v273, %v269
    %v314 = vpack.c.b16 %v274, %v270
    %v315 = vpack.c.b16 %v279, %v275
    %v316 = vpack.c.b16 %v280, %v276
    %v317 = vpack.c.b16 %v281, %v277
    %v318 = vpack.c.b16 %v282, %v278
    %v319 = vpack.c.b16 %v287, %v283
    %v320 = vpack.c.b16 %v288, %v284
    %v321 = vpack.c.b16 %v289, %v285
    %v322 = vpack.c.b16 %v290, %v286
    %355 = vmatprep.subr.bf16.mxu0 %v292
    %356 = vmatpush1.bf16.msra.mxu0 %v291
    %357 = vmatprep.subr.bf16.mxu0 %v296
    %358 = vmatpush1.bf16.msra.mxu0 %v295
    %359 = vmatprep.subr.bf16.mxu0 %v300
    %360 = vmatpush1.bf16.msra.mxu0 %v299
    %361 = vmatprep.subr.bf16.mxu0 %v304
    %362 = vmatpush1.bf16.msra.mxu0 %v303
    %363 = vmatprep.subr.bf16.mxu0 %v308
    %364 = vmatpush1.bf16.msra.mxu0 %v307
    %365 = vmatprep.subr.bf16.mxu0 %v312
    %366 = vmatpush1.bf16.msra.mxu0 %v311
    %367 = vmatprep.subr.bf16.mxu0 %v316
    %368 = vmatpush1.bf16.msra.mxu0 %v315
    %369 = vmatprep.subr.bf16.mxu0 %v320
    %370 = vmatpush1.bf16.msra.mxu0 %v319
    %371 = vmatprep.subr.bf16.mxu0 0
    %372 = vmatpush1.bf16.msra.mxu0 0
    %373 = vmatprep.subr.bf16.mxu0 0
    %374 = vmatpush1.bf16.msra.mxu0 0
    %375 = vmatprep.subr.bf16.mxu0 0
    %376 = vmatpush1.bf16.msra.mxu0 0
    %377 = vmatprep.subr.bf16.mxu0 0
    %378 = vmatpush1.bf16.msra.mxu0 0
    %379 = vmatprep.subr.bf16.mxu0 0
    %380 = vmatpush1.bf16.msra.mxu0 0
    %381 = vmatprep.subr.bf16.mxu0 0
    %382 = vmatpush1.bf16.msra.mxu0 0
    %383 = vmatprep.subr.bf16.mxu0 0
    %384 = vmatpush1.bf16.msra.mxu0 0
    %385 = vmatprep.subr.bf16.mxu0 0
    %386 = vmatpush1.bf16.msra.mxu0 0
    %387 = vmatprep.mubr.bf16.mxu0 0
    %388 = vmatmul.mubr.bf16.gmra.mrb[0].mxu0 %v173
    %v389 = vpop.f32.mrb[0].mxu0
    %v390 = vadd.f32 %v178, %v389
    %v391 = vpop.f32.mrb[0].mxu0
    %v392 = vadd.f32 %v182, %v391
    %v393 = vpop.f32.mrb[0].mxu0
    %v394 = vpop.f32.mrb[0].mxu0
    %395 = vdwg.mxu0
    %396 = vmatprep.subr.bf16.mxu0 %v294
    %397 = vmatpush1.bf16.msra.mxu0 %v293
    %398 = vmatprep.subr.bf16.mxu0 %v298
    %399 = vmatpush1.bf16.msra.mxu0 %v297
    %400 = vmatprep.subr.bf16.mxu0 %v302
    %401 = vmatpush1.bf16.msra.mxu0 %v301
    %402 = vmatprep.subr.bf16.mxu0 %v306
    %403 = vmatpush1.bf16.msra.mxu0 %v305
    %404 = vmatprep.subr.bf16.mxu0 %v310
    %405 = vmatpush1.bf16.msra.mxu0 %v309
    %406 = vmatprep.subr.bf16.mxu0 %v314
    %407 = vmatpush1.bf16.msra.mxu0 %v313
    %408 = vmatprep.subr.bf16.mxu0 %v318
    %409 = vmatpush1.bf16.msra.mxu0 %v317
    %410 = vmatprep.subr.bf16.mxu0 %v322
    %411 = vmatpush1.bf16.msra.mxu0 %v321
    %412 = vmatprep.subr.bf16.mxu0 0
    %413 = vmatpush1.bf16.msra.mxu0 0
    %414 = vmatprep.subr.bf16.mxu0 0
    %415 = vmatpush1.bf16.msra.mxu0 0
    %416 = vmatprep.subr.bf16.mxu0 0
    %417 = vmatpush1.bf16.msra.mxu0 0
    %418 = vmatprep.subr.bf16.mxu0 0
    %419 = vmatpush1.bf16.msra.mxu0 0
    %420 = vmatprep.subr.bf16.mxu0 0
    %421 = vmatpush1.bf16.msra.mxu0 0
    %422 = vmatprep.subr.bf16.mxu0 0
    %423 = vmatpush1.bf16.msra.mxu0 0
    %424 = vmatprep.subr.bf16.mxu0 0
    %425 = vmatpush1.bf16.msra.mxu0 0
    %426 = vmatprep.subr.bf16.mxu0 0
    %427 = vmatpush1.bf16.msra.mxu0 0
    %428 = vmatprep.mubr.bf16.mxu0 0
    %429 = vmatmul.mubr.bf16.gmra.mrb[0].mxu0 %v173
    %v430 = vpop.f32.mrb[0].mxu0
    %v431 = vadd.f32 %v186, %v430
    %v432 = vpop.f32.mrb[0].mxu0
    %v433 = vadd.f32 %v190, %v432
    %v434 = vpop.f32.mrb[0].mxu0
    %v435 = vpop.f32.mrb[0].mxu0
    %436 = vdwg.mxu0
    %v437 = vmax.f32 %v390, 0.0
    %v438 = vmax.f32 %v392, 0.0
    %v439 = vmax.f32 %v431, 0.0
    %v440 = vmax.f32 %v433, 0.0
    %v441 = vld [vmem:[#allocation7] sm:$0xff]
    %v442 = vld [vmem:[#allocation7 + $0x8] sm:$0xff]
    %v443 = vld [vmem:[#allocation7 + $0x10] sm:$0xff]
    %v444 = vld [vmem:[#allocation7 + $0x18] sm:$0xff]
    %v445 = vld [vmem:[#allocation7 + $0x20] sm:$0xff]
    %v446 = vld [vmem:[#allocation7 + $0x28] sm:$0xff]
    %v447 = vld [vmem:[#allocation7 + $0x30] sm:$0xff]
    %v448 = vld [vmem:[#allocation7 + $0x38] sm:$0xff]
    %v449 = vld [vmem:[#allocation7 + $0x40] sm:$0xff]
    %v450 = vld [vmem:[#allocation7 + $0x48] sm:$0xff]
    %v451 = vld [vmem:[#allocation7 + $0x50] sm:$0xff]
    %v452 = vld [vmem:[#allocation7 + $0x58] sm:$0xff]
    %v453 = vld [vmem:[#allocation7 + $0x60] sm:$0xff]
    %v454 = vld [vmem:[#allocation7 + $0x68] sm:$0xff]
    %v455 = vld [vmem:[#allocation7 + $0x70] sm:$0xff]
    %v456 = vld [vmem:[#allocation7 + $0x78] sm:$0xff]
    %v457 = vld [vmem:[#allocation7 + $0x80] sm:$0xff]
    %v458 = vld [vmem:[#allocation7 + $0x88] sm:$0xff]
    %v459 = vld [vmem:[#allocation7 + $0x90] sm:$0xff]
    %v460 = vld [vmem:[#allocation7 + $0x98] sm:$0xff]
    %v461 = vld [vmem:[#allocation7 + $0xa0] sm:$0xff]
    %v462 = vld [vmem:[#allocation7 + $0xa8] sm:$0xff]
    %v463 = vld [vmem:[#allocation7 + $0xb0] sm:$0xff]
    %v464 = vld [vmem:[#allocation7 + $0xb8] sm:$0xff]
    %v465 = vld [vmem:[#allocation7 + $0xc0] sm:$0xff]
    %v466 = vld [vmem:[#allocation7 + $0xc8] sm:$0xff]
    %v467 = vld [vmem:[#allocation7 + $0xd0] sm:$0xff]
    %v468 = vld [vmem:[#allocation7 + $0xd8] sm:$0xff]
    %v469 = vld [vmem:[#allocation7 + $0xe0] sm:$0xff]
    %v470 = vld [vmem:[#allocation7 + $0xe8] sm:$0xff]
    %v471 = vld [vmem:[#allocation7 + $0xf0] sm:$0xff]
    %v472 = vld [vmem:[#allocation7 + $0xf8] sm:$0xff]
    %v473 = vld [vmem:[#allocation7 + $0x100] sm:$0xff]
    %v474 = vld [vmem:[#allocation7 + $0x108] sm:$0xff]
    %v475 = vld [vmem:[#allocation7 + $0x110] sm:$0xff]
    %v476 = vld [vmem:[#allocation7 + $0x118] sm:$0xff]
    %v477 = vld [vmem:[#allocation7 + $0x120] sm:$0xff]
    %v478 = vld [vmem:[#allocation7 + $0x128] sm:$0xff]
    %v479 = vld [vmem:[#allocation7 + $0x130] sm:$0xff]
    %v480 = vld [vmem:[#allocation7 + $0x138] sm:$0xff]
    %v481 = vld [vmem:[#allocation7 + $0x140] sm:$0xff]
    %v482 = vld [vmem:[#allocation7 + $0x148] sm:$0xff]
    %v483 = vld [vmem:[#allocation7 + $0x150] sm:$0xff]
    %v484 = vld [vmem:[#allocation7 + $0x158] sm:$0xff]
    %v485 = vld [vmem:[#allocation7 + $0x160] sm:$0xff]
    %v486 = vld [vmem:[#allocation7 + $0x168] sm:$0xff]
    %v487 = vld [vmem:[#allocation7 + $0x170] sm:$0xff]
    %v488 = vld [vmem:[#allocation7 + $0x178] sm:$0xff]
    %v489 = vld [vmem:[#allocation7 + $0x180] sm:$0xff]
    %v490 = vld [vmem:[#allocation7 + $0x188] sm:$0xff]
    %v491 = vld [vmem:[#allocation7 + $0x190] sm:$0xff]
    %v492 = vld [vmem:[#allocation7 + $0x198] sm:$0xff]
    %v493 = vld [vmem:[#allocation7 + $0x1a0] sm:$0xff]
    %v494 = vld [vmem:[#allocation7 + $0x1a8] sm:$0xff]
    %v495 = vld [vmem:[#allocation7 + $0x1b0] sm:$0xff]
    %v496 = vld [vmem:[#allocation7 + $0x1b8] sm:$0xff]
    %v497 = vld [vmem:[#allocation7 + $0x1c0] sm:$0xff]
    %v498 = vld [vmem:[#allocation7 + $0x1c8] sm:$0xff]
    %v499 = vld [vmem:[#allocation7 + $0x1d0] sm:$0xff]
    %v500 = vld [vmem:[#allocation7 + $0x1d8] sm:$0xff]
    %v501 = vld [vmem:[#allocation7 + $0x1e0] sm:$0xff]
    %v502 = vld [vmem:[#allocation7 + $0x1e8] sm:$0xff]
    %v503 = vld [vmem:[#allocation7 + $0x1f0] sm:$0xff]
    %v504 = vld [vmem:[#allocation7 + $0x1f8] sm:$0xff]
    %v505 = vld [vmem:[#allocation7 + $0x200] sm:$0xff]
    %v506 = vld [vmem:[#allocation7 + $0x208] sm:$0xff]
    %v507 = vld [vmem:[#allocation7 + $0x210] sm:$0xff]
    %v508 = vld [vmem:[#allocation7 + $0x218] sm:$0xff]
    %v509 = vld [vmem:[#allocation7 + $0x220] sm:$0xff]
    %v510 = vld [vmem:[#allocation7 + $0x228] sm:$0xff]
    %v511 = vld [vmem:[#allocation7 + $0x230] sm:$0xff]
    %v512 = vld [vmem:[#allocation7 + $0x238] sm:$0xff]
    %v513 = vld [vmem:[#allocation7 + $0x240] sm:$0xff]
    %v514 = vld [vmem:[#allocation7 + $0x248] sm:$0xff]
    %v515 = vld [vmem:[#allocation7 + $0x250] sm:$0xff]
    %v516 = vld [vmem:[#allocation7 + $0x258] sm:$0xff]
    %v517 = vld [vmem:[#allocation7 + $0x260] sm:$0xff]
    %v518 = vld [vmem:[#allocation7 + $0x268] sm:$0xff]
    %v519 = vld [vmem:[#allocation7 + $0x270] sm:$0xff]
    %v520 = vld [vmem:[#allocation7 + $0x278] sm:$0xff]
    %v521 = vld [vmem:[#allocation7 + $0x280] sm:$0xff]
    %v522 = vld [vmem:[#allocation7 + $0x288] sm:$0xff]
    %v523 = vld [vmem:[#allocation7 + $0x290] sm:$0xff]
    %v524 = vld [vmem:[#allocation7 + $0x298] sm:$0xff]
    %v525 = vld [vmem:[#allocation7 + $0x2a0] sm:$0xff]
    %v526 = vld [vmem:[#allocation7 + $0x2a8] sm:$0xff]
    %v527 = vld [vmem:[#allocation7 + $0x2b0] sm:$0xff]
    %v528 = vld [vmem:[#allocation7 + $0x2b8] sm:$0xff]
    %v529 = vld [vmem:[#allocation7 + $0x2c0] sm:$0xff]
    %v530 = vld [vmem:[#allocation7 + $0x2c8] sm:$0xff]
    %v531 = vld [vmem:[#allocation7 + $0x2d0] sm:$0xff]
    %v532 = vld [vmem:[#allocation7 + $0x2d8] sm:$0xff]
    %v533 = vld [vmem:[#allocation7 + $0x2e0] sm:$0xff]
    %v534 = vld [vmem:[#allocation7 + $0x2e8] sm:$0xff]
    %v535 = vld [vmem:[#allocation7 + $0x2f0] sm:$0xff]
    %v536 = vld [vmem:[#allocation7 + $0x2f8] sm:$0xff]
    %v537 = vld [vmem:[#allocation7 + $0x300] sm:$0xff]
    %v538 = vld [vmem:[#allocation7 + $0x308] sm:$0xff]
    %v539 = vld [vmem:[#allocation7 + $0x310] sm:$0xff]
    %v540 = vld [vmem:[#allocation7 + $0x318] sm:$0xff]
    %v541 = vld [vmem:[#allocation7 + $0x320] sm:$0xff]
    %v542 = vld [vmem:[#allocation7 + $0x328] sm:$0xff]
    %v543 = vld [vmem:[#allocation7 + $0x330] sm:$0xff]
    %v544 = vld [vmem:[#allocation7 + $0x338] sm:$0xff]
    %v545 = vld [vmem:[#allocation7 + $0x340] sm:$0xff]
    %v546 = vld [vmem:[#allocation7 + $0x348] sm:$0xff]
    %v547 = vld [vmem:[#allocation7 + $0x350] sm:$0xff]
    %v548 = vld [vmem:[#allocation7 + $0x358] sm:$0xff]
    %v549 = vld [vmem:[#allocation7 + $0x360] sm:$0xff]
    %v550 = vld [vmem:[#allocation7 + $0x368] sm:$0xff]
    %v551 = vld [vmem:[#allocation7 + $0x370] sm:$0xff]
    %v552 = vld [vmem:[#allocation7 + $0x378] sm:$0xff]
    %v553 = vld [vmem:[#allocation7 + $0x380] sm:$0xff]
    %v554 = vld [vmem:[#allocation7 + $0x388] sm:$0xff]
    %v555 = vld [vmem:[#allocation7 + $0x390] sm:$0xff]
    %v556 = vld [vmem:[#allocation7 + $0x398] sm:$0xff]
    %v557 = vld [vmem:[#allocation7 + $0x3a0] sm:$0xff]
    %v558 = vld [vmem:[#allocation7 + $0x3a8] sm:$0xff]
    %v559 = vld [vmem:[#allocation7 + $0x3b0] sm:$0xff]
    %v560 = vld [vmem:[#allocation7 + $0x3b8] sm:$0xff]
    %v561 = vld [vmem:[#allocation7 + $0x3c0] sm:$0xff]
    %v562 = vld [vmem:[#allocation7 + $0x3c8] sm:$0xff]
    %v563 = vld [vmem:[#allocation7 + $0x3d0] sm:$0xff]
    %v564 = vld [vmem:[#allocation7 + $0x3d8] sm:$0xff]
    %v565 = vld [vmem:[#allocation7 + $0x3e0] sm:$0xff]
    %v566 = vld [vmem:[#allocation7 + $0x3e8] sm:$0xff]
    %v567 = vld [vmem:[#allocation7 + $0x3f0] sm:$0xff]
    %v568 = vld [vmem:[#allocation7 + $0x3f8] sm:$0xff]
    %v569 = vld [vmem:[%s4] sm:$0xf]
    %v570 = vpack.c.bf16 %v437, %v437
    %v571 = vpack.c.bf16 %v438, %v438
    %v572 = vpack.c.bf16 %v439, %v439
    %v573 = vpack.c.bf16 %v440, %v440
    %v575 = vlaneseq
    %v576 = vshrl.u32 %v575, 7
    %v577 = vsub.s32 0, %v576
    %v578 = vrot.slane %v569, %v577
    %v579 = vlaneseq
    %v580 = vshrl.u32 %v579, 7
    %v581 = vsub.s32 1, %v580
    %v582 = vrot.slane %v569, %v581
    %v583 = vlaneseq
    %v584 = vshrl.u32 %v583, 7
    %v585 = vsub.s32 2, %v584
    %v586 = vrot.slane %v569, %v585
    %v587 = vlaneseq
    %v588 = vshrl.u32 %v587, 7
    %v589 = vsub.s32 3, %v588
    %v590 = vrot.slane %v569, %v589
    %v723 = vunpack.c.l.b16 %v441
    %v724 = vunpack.c.h.b16 %v441
    %v725 = vunpack.c.l.b16 %v442
    %v726 = vunpack.c.h.b16 %v442
    %v727 = vunpack.c.l.b16 %v443
    %v728 = vunpack.c.h.b16 %v443
    %v729 = vunpack.c.l.b16 %v444
    %v730 = vunpack.c.h.b16 %v444
    %v731 = vunpack.c.l.b16 %v445
    %v732 = vunpack.c.h.b16 %v445
    %v733 = vunpack.c.l.b16 %v446
    %v734 = vunpack.c.h.b16 %v446
    %v735 = vunpack.c.l.b16 %v447
    %v736 = vunpack.c.h.b16 %v447
    %v737 = vunpack.c.l.b16 %v448
    %v738 = vunpack.c.h.b16 %v448
    %v739 = vunpack.c.l.b16 %v449
    %v740 = vunpack.c.h.b16 %v449
    %v741 = vunpack.c.l.b16 %v450
    %v742 = vunpack.c.h.b16 %v450
    %v743 = vunpack.c.l.b16 %v451
    %v744 = vunpack.c.h.b16 %v451
    %v745 = vunpack.c.l.b16 %v452
    %v746 = vunpack.c.h.b16 %v452
    %v747 = vunpack.c.l.b16 %v453
    %v748 = vunpack.c.h.b16 %v453
    %v749 = vunpack.c.l.b16 %v454
    %v750 = vunpack.c.h.b16 %v454
    %v751 = vunpack.c.l.b16 %v455
    %v752 = vunpack.c.h.b16 %v455
    %v753 = vunpack.c.l.b16 %v456
    %v754 = vunpack.c.h.b16 %v456
    %v755 = vunpack.c.l.b16 %v457
    %v756 = vunpack.c.h.b16 %v457
    %v757 = vunpack.c.l.b16 %v458
    %v758 = vunpack.c.h.b16 %v458
    %v759 = vunpack.c.l.b16 %v459
    %v760 = vunpack.c.h.b16 %v459
    %v761 = vunpack.c.l.b16 %v460
    %v762 = vunpack.c.h.b16 %v460
    %v763 = vunpack.c.l.b16 %v461
    %v764 = vunpack.c.h.b16 %v461
    %v765 = vunpack.c.l.b16 %v462
    %v766 = vunpack.c.h.b16 %v462
    %v767 = vunpack.c.l.b16 %v463
    %v768 = vunpack.c.h.b16 %v463
    %v769 = vunpack.c.l.b16 %v464
    %v770 = vunpack.c.h.b16 %v464
    %v771 = vunpack.c.l.b16 %v465
    %v772 = vunpack.c.h.b16 %v465
    %v773 = vunpack.c.l.b16 %v466
    %v774 = vunpack.c.h.b16 %v466
    %v775 = vunpack.c.l.b16 %v467
    %v776 = vunpack.c.h.b16 %v467
    %v777 = vunpack.c.l.b16 %v468
    %v778 = vunpack.c.h.b16 %v468
    %v779 = vunpack.c.l.b16 %v469
    %v780 = vunpack.c.h.b16 %v469
    %v781 = vunpack.c.l.b16 %v470
    %v782 = vunpack.c.h.b16 %v470
    %v783 = vunpack.c.l.b16 %v471
    %v784 = vunpack.c.h.b16 %v471
    %v785 = vunpack.c.l.b16 %v472
    %v786 = vunpack.c.h.b16 %v472
    %v787 = vunpack.c.l.b16 %v473
    %v788 = vunpack.c.h.b16 %v473
    %v789 = vunpack.c.l.b16 %v474
    %v790 = vunpack.c.h.b16 %v474
    %v791 = vunpack.c.l.b16 %v475
    %v792 = vunpack.c.h.b16 %v475
    %v793 = vunpack.c.l.b16 %v476
    %v794 = vunpack.c.h.b16 %v476
    %v795 = vunpack.c.l.b16 %v477
    %v796 = vunpack.c.h.b16 %v477
    %v797 = vunpack.c.l.b16 %v478
    %v798 = vunpack.c.h.b16 %v478
    %v799 = vunpack.c.l.b16 %v479
    %v800 = vunpack.c.h.b16 %v479
    %v801 = vunpack.c.l.b16 %v480
    %v802 = vunpack.c.h.b16 %v480
    %v803 = vunpack.c.l.b16 %v481
    %v804 = vunpack.c.h.b16 %v481
    %v805 = vunpack.c.l.b16 %v482
    %v806 = vunpack.c.h.b16 %v482
    %v807 = vunpack.c.l.b16 %v483
    %v808 = vunpack.c.h.b16 %v483
    %v809 = vunpack.c.l.b16 %v484
    %v810 = vunpack.c.h.b16 %v484
    %v811 = vunpack.c.l.b16 %v485
    %v812 = vunpack.c.h.b16 %v485
    %v813 = vunpack.c.l.b16 %v486
    %v814 = vunpack.c.h.b16 %v486
    %v815 = vunpack.c.l.b16 %v487
    %v816 = vunpack.c.h.b16 %v487
    %v817 = vunpack.c.l.b16 %v488
    %v818 = vunpack.c.h.b16 %v488
    %v819 = vunpack.c.l.b16 %v489
    %v820 = vunpack.c.h.b16 %v489
    %v821 = vunpack.c.l.b16 %v490
    %v822 = vunpack.c.h.b16 %v490
    %v823 = vunpack.c.l.b16 %v491
    %v824 = vunpack.c.h.b16 %v491
    %v825 = vunpack.c.l.b16 %v492
    %v826 = vunpack.c.h.b16 %v492
    %v827 = vunpack.c.l.b16 %v493
    %v828 = vunpack.c.h.b16 %v493
    %v829 = vunpack.c.l.b16 %v494
    %v830 = vunpack.c.h.b16 %v494
    %v831 = vunpack.c.l.b16 %v495
    %v832 = vunpack.c.h.b16 %v495
    %v833 = vunpack.c.l.b16 %v496
    %v834 = vunpack.c.h.b16 %v496
    %v835 = vunpack.c.l.b16 %v497
    %v836 = vunpack.c.h.b16 %v497
    %v837 = vunpack.c.l.b16 %v498
    %v838 = vunpack.c.h.b16 %v498
    %v839 = vunpack.c.l.b16 %v499
    %v840 = vunpack.c.h.b16 %v499
    %v841 = vunpack.c.l.b16 %v500
    %v842 = vunpack.c.h.b16 %v500
    %v843 = vunpack.c.l.b16 %v501
    %v844 = vunpack.c.h.b16 %v501
    %v845 = vunpack.c.l.b16 %v502
    %v846 = vunpack.c.h.b16 %v502
    %v847 = vunpack.c.l.b16 %v503
    %v848 = vunpack.c.h.b16 %v503
    %v849 = vunpack.c.l.b16 %v504
    %v850 = vunpack.c.h.b16 %v504
    %v851 = vunpack.c.l.b16 %v505
    %v852 = vunpack.c.h.b16 %v505
    %v853 = vunpack.c.l.b16 %v506
    %v854 = vunpack.c.h.b16 %v506
    %v855 = vunpack.c.l.b16 %v507
    %v856 = vunpack.c.h.b16 %v507
    %v857 = vunpack.c.l.b16 %v508
    %v858 = vunpack.c.h.b16 %v508
    %v859 = vunpack.c.l.b16 %v509
    %v860 = vunpack.c.h.b16 %v509
    %v861 = vunpack.c.l.b16 %v510
    %v862 = vunpack.c.h.b16 %v510
    %v863 = vunpack.c.l.b16 %v511
    %v864 = vunpack.c.h.b16 %v511
    %v865 = vunpack.c.l.b16 %v512
    %v866 = vunpack.c.h.b16 %v512
    %v867 = vunpack.c.l.b16 %v513
    %v868 = vunpack.c.h.b16 %v513
    %v869 = vunpack.c.l.b16 %v514
    %v870 = vunpack.c.h.b16 %v514
    %v871 = vunpack.c.l.b16 %v515
    %v872 = vunpack.c.h.b16 %v515
    %v873 = vunpack.c.l.b16 %v516
    %v874 = vunpack.c.h.b16 %v516
    %v875 = vunpack.c.l.b16 %v517
    %v876 = vunpack.c.h.b16 %v517
    %v877 = vunpack.c.l.b16 %v518
    %v878 = vunpack.c.h.b16 %v518
    %v879 = vunpack.c.l.b16 %v519
    %v880 = vunpack.c.h.b16 %v519
    %v881 = vunpack.c.l.b16 %v520
    %v882 = vunpack.c.h.b16 %v520
    %v883 = vunpack.c.l.b16 %v521
    %v884 = vunpack.c.h.b16 %v521
    %v885 = vunpack.c.l.b16 %v522
    %v886 = vunpack.c.h.b16 %v522
    %v887 = vunpack.c.l.b16 %v523
    %v888 = vunpack.c.h.b16 %v523
    %v889 = vunpack.c.l.b16 %v524
    %v890 = vunpack.c.h.b16 %v524
    %v891 = vunpack.c.l.b16 %v525
    %v892 = vunpack.c.h.b16 %v525
    %v893 = vunpack.c.l.b16 %v526
    %v894 = vunpack.c.h.b16 %v526
    %v895 = vunpack.c.l.b16 %v527
    %v896 = vunpack.c.h.b16 %v527
    %v897 = vunpack.c.l.b16 %v528
    %v898 = vunpack.c.h.b16 %v528
    %v899 = vunpack.c.l.b16 %v529
    %v900 = vunpack.c.h.b16 %v529
    %v901 = vunpack.c.l.b16 %v530
    %v902 = vunpack.c.h.b16 %v530
    %v903 = vunpack.c.l.b16 %v531
    %v904 = vunpack.c.h.b16 %v531
    %v905 = vunpack.c.l.b16 %v532
    %v906 = vunpack.c.h.b16 %v532
    %v907 = vunpack.c.l.b16 %v533
    %v908 = vunpack.c.h.b16 %v533
    %v909 = vunpack.c.l.b16 %v534
    %v910 = vunpack.c.h.b16 %v534
    %v911 = vunpack.c.l.b16 %v535
    %v912 = vunpack.c.h.b16 %v535
    %v913 = vunpack.c.l.b16 %v536
    %v914 = vunpack.c.h.b16 %v536
    %v915 = vunpack.c.l.b16 %v537
    %v916 = vunpack.c.h.b16 %v537
    %v917 = vunpack.c.l.b16 %v538
    %v918 = vunpack.c.h.b16 %v538
    %v919 = vunpack.c.l.b16 %v539
    %v920 = vunpack.c.h.b16 %v539
    %v921 = vunpack.c.l.b16 %v540
    %v922 = vunpack.c.h.b16 %v540
    %v923 = vunpack.c.l.b16 %v541
    %v924 = vunpack.c.h.b16 %v541
    %v925 = vunpack.c.l.b16 %v542
    %v926 = vunpack.c.h.b16 %v542
    %v927 = vunpack.c.l.b16 %v543
    %v928 = vunpack.c.h.b16 %v543
    %v929 = vunpack.c.l.b16 %v544
    %v930 = vunpack.c.h.b16 %v544
    %v931 = vunpack.c.l.b16 %v545
    %v932 = vunpack.c.h.b16 %v545
    %v933 = vunpack.c.l.b16 %v546
    %v934 = vunpack.c.h.b16 %v546
    %v935 = vunpack.c.l.b16 %v547
    %v936 = vunpack.c.h.b16 %v547
    %v937 = vunpack.c.l.b16 %v548
    %v938 = vunpack.c.h.b16 %v548
    %v939 = vunpack.c.l.b16 %v549
    %v940 = vunpack.c.h.b16 %v549
    %v941 = vunpack.c.l.b16 %v550
    %v942 = vunpack.c.h.b16 %v550
    %v943 = vunpack.c.l.b16 %v551
    %v944 = vunpack.c.h.b16 %v551
    %v945 = vunpack.c.l.b16 %v552
    %v946 = vunpack.c.h.b16 %v552
    %v947 = vunpack.c.l.b16 %v553
    %v948 = vunpack.c.h.b16 %v553
    %v949 = vunpack.c.l.b16 %v554
    %v950 = vunpack.c.h.b16 %v554
    %v951 = vunpack.c.l.b16 %v555
    %v952 = vunpack.c.h.b16 %v555
    %v953 = vunpack.c.l.b16 %v556
    %v954 = vunpack.c.h.b16 %v556
    %v955 = vunpack.c.l.b16 %v557
    %v956 = vunpack.c.h.b16 %v557
    %v957 = vunpack.c.l.b16 %v558
    %v958 = vunpack.c.h.b16 %v558
    %v959 = vunpack.c.l.b16 %v559
    %v960 = vunpack.c.h.b16 %v559
    %v961 = vunpack.c.l.b16 %v560
    %v962 = vunpack.c.h.b16 %v560
    %v963 = vunpack.c.l.b16 %v561
    %v964 = vunpack.c.h.b16 %v561
    %v965 = vunpack.c.l.b16 %v562
    %v966 = vunpack.c.h.b16 %v562
    %v967 = vunpack.c.l.b16 %v563
    %v968 = vunpack.c.h.b16 %v563
    %v969 = vunpack.c.l.b16 %v564
    %v970 = vunpack.c.h.b16 %v564
    %v971 = vunpack.c.l.b16 %v565
    %v972 = vunpack.c.h.b16 %v565
    %v973 = vunpack.c.l.b16 %v566
    %v974 = vunpack.c.h.b16 %v566
    %v975 = vunpack.c.l.b16 %v567
    %v976 = vunpack.c.h.b16 %v567
    %v977 = vunpack.c.l.b16 %v568
    %v978 = vunpack.c.h.b16 %v568
    %v979 = vpack.c.b16 %v727, %v723
    %v980 = vpack.c.b16 %v728, %v724
    %v981 = vpack.c.b16 %v729, %v725
    %v982 = vpack.c.b16 %v730, %v726
    %v983 = vpack.c.b16 %v735, %v731
    %v984 = vpack.c.b16 %v736, %v732
    %v985 = vpack.c.b16 %v737, %v733
    %v986 = vpack.c.b16 %v738, %v734
    %v987 = vpack.c.b16 %v743, %v739
    %v988 = vpack.c.b16 %v744, %v740
    %v989 = vpack.c.b16 %v745, %v741
    %v990 = vpack.c.b16 %v746, %v742
    %v991 = vpack.c.b16 %v751, %v747
    %v992 = vpack.c.b16 %v752, %v748
    %v993 = vpack.c.b16 %v753, %v749
    %v994 = vpack.c.b16 %v754, %v750
    %v995 = vpack.c.b16 %v759, %v755
    %v996 = vpack.c.b16 %v760, %v756
    %v997 = vpack.c.b16 %v761, %v757
    %v998 = vpack.c.b16 %v762, %v758
    %v999 = vpack.c.b16 %v767, %v763
    %v1000 = vpack.c.b16 %v768, %v764
    %v1001 = vpack.c.b16 %v769, %v765
    %v1002 = vpack.c.b16 %v770, %v766
    %v1003 = vpack.c.b16 %v775, %v771
    %v1004 = vpack.c.b16 %v776, %v772
    %v1005 = vpack.c.b16 %v777, %v773
    %v1006 = vpack.c.b16 %v778, %v774
    %v1007 = vpack.c.b16 %v783, %v779
    %v1008 = vpack.c.b16 %v784, %v780
    %v1009 = vpack.c.b16 %v785, %v781
    %v1010 = vpack.c.b16 %v786, %v782
    %v1011 = vpack.c.b16 %v791, %v787
    %v1012 = vpack.c.b16 %v792, %v788
    %v1013 = vpack.c.b16 %v793, %v789
    %v1014 = vpack.c.b16 %v794, %v790
    %v1015 = vpack.c.b16 %v799, %v795
    %v1016 = vpack.c.b16 %v800, %v796
    %v1017 = vpack.c.b16 %v801, %v797
    %v1018 = vpack.c.b16 %v802, %v798
    %v1019 = vpack.c.b16 %v807, %v803
    %v1020 = vpack.c.b16 %v808, %v804
    %v1021 = vpack.c.b16 %v809, %v805
    %v1022 = vpack.c.b16 %v810, %v806
    %v1023 = vpack.c.b16 %v815, %v811
    %v1024 = vpack.c.b16 %v816, %v812
    %v1025 = vpack.c.b16 %v817, %v813
    %v1026 = vpack.c.b16 %v818, %v814
    %v1027 = vpack.c.b16 %v823, %v819
    %v1028 = vpack.c.b16 %v824, %v820
    %v1029 = vpack.c.b16 %v825, %v821
    %v1030 = vpack.c.b16 %v826, %v822
    %v1031 = vpack.c.b16 %v831, %v827
    %v1032 = vpack.c.b16 %v832, %v828
    %v1033 = vpack.c.b16 %v833, %v829
    %v1034 = vpack.c.b16 %v834, %v830
    %v1035 = vpack.c.b16 %v839, %v835
    %v1036 = vpack.c.b16 %v840, %v836
    %v1037 = vpack.c.b16 %v841, %v837
    %v1038 = vpack.c.b16 %v842, %v838
    %v1039 = vpack.c.b16 %v847, %v843
    %v1040 = vpack.c.b16 %v848, %v844
    %v1041 = vpack.c.b16 %v849, %v845
    %v1042 = vpack.c.b16 %v850, %v846
    %v1043 = vpack.c.b16 %v855, %v851
    %v1044 = vpack.c.b16 %v856, %v852
    %v1045 = vpack.c.b16 %v857, %v853
    %v1046 = vpack.c.b16 %v858, %v854
    %v1047 = vpack.c.b16 %v863, %v859
    %v1048 = vpack.c.b16 %v864, %v860
    %v1049 = vpack.c.b16 %v865, %v861
    %v1050 = vpack.c.b16 %v866, %v862
    %v1051 = vpack.c.b16 %v871, %v867
    %v1052 = vpack.c.b16 %v872, %v868
    %v1053 = vpack.c.b16 %v873, %v869
    %v1054 = vpack.c.b16 %v874, %v870
    %v1055 = vpack.c.b16 %v879, %v875
    %v1056 = vpack.c.b16 %v880, %v876
    %v1057 = vpack.c.b16 %v881, %v877
    %v1058 = vpack.c.b16 %v882, %v878
    %v1059 = vpack.c.b16 %v887, %v883
    %v1060 = vpack.c.b16 %v888, %v884
    %v1061 = vpack.c.b16 %v889, %v885
    %v1062 = vpack.c.b16 %v890, %v886
    %v1063 = vpack.c.b16 %v895, %v891
    %v1064 = vpack.c.b16 %v896, %v892
    %v1065 = vpack.c.b16 %v897, %v893
    %v1066 = vpack.c.b16 %v898, %v894
    %v1067 = vpack.c.b16 %v903, %v899
    %v1068 = vpack.c.b16 %v904, %v900
    %v1069 = vpack.c.b16 %v905, %v901
    %v1070 = vpack.c.b16 %v906, %v902
    %v1071 = vpack.c.b16 %v911, %v907
    %v1072 = vpack.c.b16 %v912, %v908
    %v1073 = vpack.c.b16 %v913, %v909
    %v1074 = vpack.c.b16 %v914, %v910
    %v1075 = vpack.c.b16 %v919, %v915
    %v1076 = vpack.c.b16 %v920, %v916
    %v1077 = vpack.c.b16 %v921, %v917
    %v1078 = vpack.c.b16 %v922, %v918
    %v1079 = vpack.c.b16 %v927, %v923
    %v1080 = vpack.c.b16 %v928, %v924
    %v1081 = vpack.c.b16 %v929, %v925
    %v1082 = vpack.c.b16 %v930, %v926
    %v1083 = vpack.c.b16 %v935, %v931
    %v1084 = vpack.c.b16 %v936, %v932
    %v1085 = vpack.c.b16 %v937, %v933
    %v1086 = vpack.c.b16 %v938, %v934
    %v1087 = vpack.c.b16 %v943, %v939
    %v1088 = vpack.c.b16 %v944, %v940
    %v1089 = vpack.c.b16 %v945, %v941
    %v1090 = vpack.c.b16 %v946, %v942
    %v1091 = vpack.c.b16 %v951, %v947
    %v1092 = vpack.c.b16 %v952, %v948
    %v1093 = vpack.c.b16 %v953, %v949
    %v1094 = vpack.c.b16 %v954, %v950
    %v1095 = vpack.c.b16 %v959, %v955
    %v1096 = vpack.c.b16 %v960, %v956
    %v1097 = vpack.c.b16 %v961, %v957
    %v1098 = vpack.c.b16 %v962, %v958
    %v1099 = vpack.c.b16 %v967, %v963
    %v1100 = vpack.c.b16 %v968, %v964
    %v1101 = vpack.c.b16 %v969, %v965
    %v1102 = vpack.c.b16 %v970, %v966
    %v1103 = vpack.c.b16 %v975, %v971
    %v1104 = vpack.c.b16 %v976, %v972
    %v1105 = vpack.c.b16 %v977, %v973
    %v1106 = vpack.c.b16 %v978, %v974
    %1235 = vmatprep.subr.bf16.mxu0 %v980
    %1236 = vmatpush1.bf16.msra.mxu0 %v979
    %1237 = vmatprep.subr.bf16.mxu0 %v984
    %1238 = vmatpush1.bf16.msra.mxu0 %v983
    %1239 = vmatprep.subr.bf16.mxu0 %v988
    %1240 = vmatpush1.bf16.msra.mxu0 %v987
    %1241 = vmatprep.subr.bf16.mxu0 %v992
    %1242 = vmatpush1.bf16.msra.mxu0 %v991
    %1243 = vmatprep.subr.bf16.mxu0 %v996
    %1244 = vmatpush1.bf16.msra.mxu0 %v995
    %1245 = vmatprep.subr.bf16.mxu0 %v1000
    %1246 = vmatpush1.bf16.msra.mxu0 %v999
    %1247 = vmatprep.subr.bf16.mxu0 %v1004
    %1248 = vmatpush1.bf16.msra.mxu0 %v1003
    %1249 = vmatprep.subr.bf16.mxu0 %v1008
    %1250 = vmatpush1.bf16.msra.mxu0 %v1007
    %1251 = vmatprep.subr.bf16.mxu0 %v1012
    %1252 = vmatpush1.bf16.msra.mxu0 %v1011
    %1253 = vmatprep.subr.bf16.mxu0 %v1016
    %1254 = vmatpush1.bf16.msra.mxu0 %v1015
    %1255 = vmatprep.subr.bf16.mxu0 %v1020
    %1256 = vmatpush1.bf16.msra.mxu0 %v1019
    %1257 = vmatprep.subr.bf16.mxu0 %v1024
    %1258 = vmatpush1.bf16.msra.mxu0 %v1023
    %1259 = vmatprep.subr.bf16.mxu0 %v1028
    %1260 = vmatpush1.bf16.msra.mxu0 %v1027
    %1261 = vmatprep.subr.bf16.mxu0 %v1032
    %1262 = vmatpush1.bf16.msra.mxu0 %v1031
    %1263 = vmatprep.subr.bf16.mxu0 %v1036
    %1264 = vmatpush1.bf16.msra.mxu0 %v1035
    %1265 = vmatprep.subr.bf16.mxu0 %v1040
    %1266 = vmatpush1.bf16.msra.mxu0 %v1039
    %1267 = vmatprep.mubr.bf16.mxu0 %v571
    %1268 = vmatmul.mubr.bf16.gmra.mrb[0].mxu0 %v570
    %v1269 = vpop.f32.mrb[0].mxu0
    %v1270 = vadd.f32 %v578, %v1269
    %v1271 = vpop.f32.mrb[0].mxu0
    %v1272 = vadd.f32 %v582, %v1271
    %v1273 = vpop.f32.mrb[0].mxu0
    %v1274 = vpop.f32.mrb[0].mxu0
    %1275 = vdwg.mxu0
    %1276 = vmatprep.subr.bf16.mxu0 %v1044
    %1277 = vmatpush1.bf16.msra.mxu0 %v1043
    %1278 = vmatprep.subr.bf16.mxu0 %v1048
    %1279 = vmatpush1.bf16.msra.mxu0 %v1047
    %1280 = vmatprep.subr.bf16.mxu0 %v1052
    %1281 = vmatpush1.bf16.msra.mxu0 %v1051
    %1282 = vmatprep.subr.bf16.mxu0 %v1056
    %1283 = vmatpush1.bf16.msra.mxu0 %v1055
    %1284 = vmatprep.subr.bf16.mxu0 %v1060
    %1285 = vmatpush1.bf16.msra.mxu0 %v1059
    %1286 = vmatprep.subr.bf16.mxu0 %v1064
    %1287 = vmatpush1.bf16.msra.mxu0 %v1063
    %1288 = vmatprep.subr.bf16.mxu0 %v1068
    %1289 = vmatpush1.bf16.msra.mxu0 %v1067
    %1290 = vmatprep.subr.bf16.mxu0 %v1072
    %1291 = vmatpush1.bf16.msra.mxu0 %v1071
    %1292 = vmatprep.subr.bf16.mxu0 %v1076
    %1293 = vmatpush1.bf16.msra.mxu0 %v1075
    %1294 = vmatprep.subr.bf16.mxu0 %v1080
    %1295 = vmatpush1.bf16.msra.mxu0 %v1079
    %1296 = vmatprep.subr.bf16.mxu0 %v1084
    %1297 = vmatpush1.bf16.msra.mxu0 %v1083
    %1298 = vmatprep.subr.bf16.mxu0 %v1088
    %1299 = vmatpush1.bf16.msra.mxu0 %v1087
    %1300 = vmatprep.subr.bf16.mxu0 %v1092
    %1301 = vmatpush1.bf16.msra.mxu0 %v1091
    %1302 = vmatprep.subr.bf16.mxu0 %v1096
    %1303 = vmatpush1.bf16.msra.mxu0 %v1095
    %1304 = vmatprep.subr.bf16.mxu0 %v1100
    %1305 = vmatpush1.bf16.msra.mxu0 %v1099
    %1306 = vmatprep.subr.bf16.mxu0 %v1104
    %1307 = vmatpush1.bf16.msra.mxu0 %v1103
    %1308 = vmatprep.mubr.bf16.mxu0 %v573
    %1309 = vmatmul.mubr.bf16.gmra.mrb[0].mxu0 %v572
    %v1310 = vpop.f32.mrb[0].mxu0
    %v1311 = vadd.f32 %v1270, %v1310
    %v1312 = vpop.f32.mrb[0].mxu0
    %v1313 = vadd.f32 %v1272, %v1312
    %v1314 = vpop.f32.mrb[0].mxu0
    %v1315 = vpop.f32.mrb[0].mxu0
    %1316 = vdwg.mxu0
    %1317 = vmatprep.subr.bf16.mxu0 %v982
    %1318 = vmatpush1.bf16.msra.mxu0 %v981
    %1319 = vmatprep.subr.bf16.mxu0 %v986
    %1320 = vmatpush1.bf16.msra.mxu0 %v985
    %1321 = vmatprep.subr.bf16.mxu0 %v990
    %1322 = vmatpush1.bf16.msra.mxu0 %v989
    %1323 = vmatprep.subr.bf16.mxu0 %v994
    %1324 = vmatpush1.bf16.msra.mxu0 %v993
    %1325 = vmatprep.subr.bf16.mxu0 %v998
    %1326 = vmatpush1.bf16.msra.mxu0 %v997
    %1327 = vmatprep.subr.bf16.mxu0 %v1002
    %1328 = vmatpush1.bf16.msra.mxu0 %v1001
    %1329 = vmatprep.subr.bf16.mxu0 %v1006
    %1330 = vmatpush1.bf16.msra.mxu0 %v1005
    %1331 = vmatprep.subr.bf16.mxu0 %v1010
    %1332 = vmatpush1.bf16.msra.mxu0 %v1009
    %1333 = vmatprep.subr.bf16.mxu0 %v1014
    %1334 = vmatpush1.bf16.msra.mxu0 %v1013
    %1335 = vmatprep.subr.bf16.mxu0 %v1018
    %1336 = vmatpush1.bf16.msra.mxu0 %v1017
    %1337 = vmatprep.subr.bf16.mxu0 %v1022
    %1338 = vmatpush1.bf16.msra.mxu0 %v1021
    %1339 = vmatprep.subr.bf16.mxu0 %v1026
    %1340 = vmatpush1.bf16.msra.mxu0 %v1025
    %1341 = vmatprep.subr.bf16.mxu0 %v1030
    %1342 = vmatpush1.bf16.msra.mxu0 %v1029
    %1343 = vmatprep.subr.bf16.mxu0 %v1034
    %1344 = vmatpush1.bf16.msra.mxu0 %v1033
    %1345 = vmatprep.subr.bf16.mxu0 %v1038
    %1346 = vmatpush1.bf16.msra.mxu0 %v1037
    %1347 = vmatprep.subr.bf16.mxu0 %v1042
    %1348 = vmatpush1.bf16.msra.mxu0 %v1041
    %1349 = vmatprep.mubr.bf16.mxu0 %v571
    %1350 = vmatmul.mubr.bf16.gmra.mrb[0].mxu0 %v570
    %v1351 = vpop.f32.mrb[0].mxu0
    %v1352 = vadd.f32 %v586, %v1351
    %v1353 = vpop.f32.mrb[0].mxu0
    %v1354 = vadd.f32 %v590, %v1353
    %v1355 = vpop.f32.mrb[0].mxu0
    %v1356 = vpop.f32.mrb[0].mxu0
    %1357 = vdwg.mxu0
    %1358 = vmatprep.subr.bf16.mxu0 %v1046
    %1359 = vmatpush1.bf16.msra.mxu0 %v1045
    %1360 = vmatprep.subr.bf16.mxu0 %v1050
    %1361 = vmatpush1.bf16.msra.mxu0 %v1049
    %1362 = vmatprep.subr.bf16.mxu0 %v1054
    %1363 = vmatpush1.bf16.msra.mxu0 %v1053
    %1364 = vmatprep.subr.bf16.mxu0 %v1058
    %1365 = vmatpush1.bf16.msra.mxu0 %v1057
    %1366 = vmatprep.subr.bf16.mxu0 %v1062
    %1367 = vmatpush1.bf16.msra.mxu0 %v1061
    %1368 = vmatprep.subr.bf16.mxu0 %v1066
    %1369 = vmatpush1.bf16.msra.mxu0 %v1065
    %1370 = vmatprep.subr.bf16.mxu0 %v1070
    %1371 = vmatpush1.bf16.msra.mxu0 %v1069
    %1372 = vmatprep.subr.bf16.mxu0 %v1074
    %1373 = vmatpush1.bf16.msra.mxu0 %v1073
    %1374 = vmatprep.subr.bf16.mxu0 %v1078
    %1375 = vmatpush1.bf16.msra.mxu0 %v1077
    %1376 = vmatprep.subr.bf16.mxu0 %v1082
    %1377 = vmatpush1.bf16.msra.mxu0 %v1081
    %1378 = vmatprep.subr.bf16.mxu0 %v1086
    %1379 = vmatpush1.bf16.msra.mxu0 %v1085
    %1380 = vmatprep.subr.bf16.mxu0 %v1090
    %1381 = vmatpush1.bf16.msra.mxu0 %v1089
    %1382 = vmatprep.subr.bf16.mxu0 %v1094
    %1383 = vmatpush1.bf16.msra.mxu0 %v1093
    %1384 = vmatprep.subr.bf16.mxu0 %v1098
    %1385 = vmatpush1.bf16.msra.mxu0 %v1097
    %1386 = vmatprep.subr.bf16.mxu0 %v1102
    %1387 = vmatpush1.bf16.msra.mxu0 %v1101
    %1388 = vmatprep.subr.bf16.mxu0 %v1106
    %1389 = vmatpush1.bf16.msra.mxu0 %v1105
    %1390 = vmatprep.mubr.bf16.mxu0 %v573
    %1391 = vmatmul.mubr.bf16.gmra.mrb[0].mxu0 %v572
    %v1392 = vpop.f32.mrb[0].mxu0
    %v1393 = vadd.f32 %v1352, %v1392
    %v1394 = vpop.f32.mrb[0].mxu0
    %v1395 = vadd.f32 %v1354, %v1394
    %v1396 = vpop.f32.mrb[0].mxu0
    %v1397 = vpop.f32.mrb[0].mxu0
    %1398 = vdwg.mxu0
    %v1399 = vmax.f32 %v1311, 0.0
    %v1400 = vmax.f32 %v1313, 0.0
    %v1401 = vmax.f32 %v1393, 0.0
    %v1402 = vmax.f32 %v1395, 0.0
    %v1403 = vld [vmem:[#allocation8] sm:$0xff]
    %v1404 = vld [vmem:[#allocation8 + $0x8] sm:$0xff]
    %v1405 = vld [vmem:[#allocation8 + $0x10] sm:$0xff]
    %v1406 = vld [vmem:[#allocation8 + $0x18] sm:$0xff]
    %v1407 = vld [vmem:[#allocation8 + $0x20] sm:$0xff]
    %v1408 = vld [vmem:[#allocation8 + $0x28] sm:$0xff]
    %v1409 = vld [vmem:[#allocation8 + $0x30] sm:$0xff]
    %v1410 = vld [vmem:[#allocation8 + $0x38] sm:$0xff]
    %v1411 = vld [vmem:[#allocation8 + $0x40] sm:$0xff]
    %v1412 = vld [vmem:[#allocation8 + $0x48] sm:$0xff]
    %v1413 = vld [vmem:[#allocation8 + $0x50] sm:$0xff]
    %v1414 = vld [vmem:[#allocation8 + $0x58] sm:$0xff]
    %v1415 = vld [vmem:[#allocation8 + $0x60] sm:$0xff]
    %v1416 = vld [vmem:[#allocation8 + $0x68] sm:$0xff]
    %v1417 = vld [vmem:[#allocation8 + $0x70] sm:$0xff]
    %v1418 = vld [vmem:[#allocation8 + $0x78] sm:$0xff]
    %v1419 = vld [vmem:[#allocation8 + $0x80] sm:$0xff]
    %v1420 = vld [vmem:[#allocation8 + $0x88] sm:$0xff]
    %v1421 = vld [vmem:[#allocation8 + $0x90] sm:$0xff]
    %v1422 = vld [vmem:[#allocation8 + $0x98] sm:$0xff]
    %v1423 = vld [vmem:[#allocation8 + $0xa0] sm:$0xff]
    %v1424 = vld [vmem:[#allocation8 + $0xa8] sm:$0xff]
    %v1425 = vld [vmem:[#allocation8 + $0xb0] sm:$0xff]
    %v1426 = vld [vmem:[#allocation8 + $0xb8] sm:$0xff]
    %v1427 = vld [vmem:[#allocation8 + $0xc0] sm:$0xff]
    %v1428 = vld [vmem:[#allocation8 + $0xc8] sm:$0xff]
    %v1429 = vld [vmem:[#allocation8 + $0xd0] sm:$0xff]
    %v1430 = vld [vmem:[#allocation8 + $0xd8] sm:$0xff]
    %v1431 = vld [vmem:[#allocation8 + $0xe0] sm:$0xff]
    %v1432 = vld [vmem:[#allocation8 + $0xe8] sm:$0xff]
    %v1433 = vld [vmem:[#allocation8 + $0xf0] sm:$0xff]
    %v1434 = vld [vmem:[#allocation8 + $0xf8] sm:$0xff]
    %v1435 = vld [vmem:[#allocation8 + $0x100] sm:$0xff]
    %v1436 = vld [vmem:[#allocation8 + $0x108] sm:$0xff]
    %v1437 = vld [vmem:[#allocation8 + $0x110] sm:$0xff]
    %v1438 = vld [vmem:[#allocation8 + $0x118] sm:$0xff]
    %v1439 = vld [vmem:[#allocation8 + $0x120] sm:$0xff]
    %v1440 = vld [vmem:[#allocation8 + $0x128] sm:$0xff]
    %v1441 = vld [vmem:[#allocation8 + $0x130] sm:$0xff]
    %v1442 = vld [vmem:[#allocation8 + $0x138] sm:$0xff]
    %v1443 = vld [vmem:[#allocation8 + $0x140] sm:$0xff]
    %v1444 = vld [vmem:[#allocation8 + $0x148] sm:$0xff]
    %v1445 = vld [vmem:[#allocation8 + $0x150] sm:$0xff]
    %v1446 = vld [vmem:[#allocation8 + $0x158] sm:$0xff]
    %v1447 = vld [vmem:[#allocation8 + $0x160] sm:$0xff]
    %v1448 = vld [vmem:[#allocation8 + $0x168] sm:$0xff]
    %v1449 = vld [vmem:[#allocation8 + $0x170] sm:$0xff]
    %v1450 = vld [vmem:[#allocation8 + $0x178] sm:$0xff]
    %v1451 = vld [vmem:[#allocation8 + $0x180] sm:$0xff]
    %v1452 = vld [vmem:[#allocation8 + $0x188] sm:$0xff]
    %v1453 = vld [vmem:[#allocation8 + $0x190] sm:$0xff]
    %v1454 = vld [vmem:[#allocation8 + $0x198] sm:$0xff]
    %v1455 = vld [vmem:[#allocation8 + $0x1a0] sm:$0xff]
    %v1456 = vld [vmem:[#allocation8 + $0x1a8] sm:$0xff]
    %v1457 = vld [vmem:[#allocation8 + $0x1b0] sm:$0xff]
    %v1458 = vld [vmem:[#allocation8 + $0x1b8] sm:$0xff]
    %v1459 = vld [vmem:[#allocation8 + $0x1c0] sm:$0xff]
    %v1460 = vld [vmem:[#allocation8 + $0x1c8] sm:$0xff]
    %v1461 = vld [vmem:[#allocation8 + $0x1d0] sm:$0xff]
    %v1462 = vld [vmem:[#allocation8 + $0x1d8] sm:$0xff]
    %v1463 = vld [vmem:[#allocation8 + $0x1e0] sm:$0xff]
    %v1464 = vld [vmem:[#allocation8 + $0x1e8] sm:$0xff]
    %v1465 = vld [vmem:[#allocation8 + $0x1f0] sm:$0xff]
    %v1466 = vld [vmem:[#allocation8 + $0x1f8] sm:$0xff]
    %v1467 = vld [vmem:[%s6] sm:$0x3]
    %v1468 = vpack.c.bf16 %v1399, %v1399
    %v1469 = vpack.c.bf16 %v1400, %v1400
    %v1470 = vpack.c.bf16 %v1401, %v1401
    %v1471 = vpack.c.bf16 %v1402, %v1402
    %v1473 = vlaneseq
    %v1474 = vshrl.u32 %v1473, 7
    %v1475 = vsub.s32 0, %v1474
    %v1476 = vrot.slane %v1467, %v1475
    %v1477 = vlaneseq
    %v1478 = vshrl.u32 %v1477, 7
    %v1479 = vsub.s32 1, %v1478
    %v1480 = vrot.slane %v1467, %v1479
    %v1547 = vunpack.c.l.b16 %v1403
    %v1548 = vunpack.c.h.b16 %v1403
    %v1549 = vunpack.c.l.b16 %v1404
    %v1550 = vunpack.c.h.b16 %v1404
    %v1551 = vunpack.c.l.b16 %v1405
    %v1552 = vunpack.c.h.b16 %v1405
    %v1553 = vunpack.c.l.b16 %v1406
    %v1554 = vunpack.c.h.b16 %v1406
    %v1555 = vunpack.c.l.b16 %v1407
    %v1556 = vunpack.c.h.b16 %v1407
    %v1557 = vunpack.c.l.b16 %v1408
    %v1558 = vunpack.c.h.b16 %v1408
    %v1559 = vunpack.c.l.b16 %v1409
    %v1560 = vunpack.c.h.b16 %v1409
    %v1561 = vunpack.c.l.b16 %v1410
    %v1562 = vunpack.c.h.b16 %v1410
    %v1563 = vunpack.c.l.b16 %v1411
    %v1564 = vunpack.c.h.b16 %v1411
    %v1565 = vunpack.c.l.b16 %v1412
    %v1566 = vunpack.c.h.b16 %v1412
    %v1567 = vunpack.c.l.b16 %v1413
    %v1568 = vunpack.c.h.b16 %v1413
    %v1569 = vunpack.c.l.b16 %v1414
    %v1570 = vunpack.c.h.b16 %v1414
    %v1571 = vunpack.c.l.b16 %v1415
    %v1572 = vunpack.c.h.b16 %v1415
    %v1573 = vunpack.c.l.b16 %v1416
    %v1574 = vunpack.c.h.b16 %v1416
    %v1575 = vunpack.c.l.b16 %v1417
    %v1576 = vunpack.c.h.b16 %v1417
    %v1577 = vunpack.c.l.b16 %v1418
    %v1578 = vunpack.c.h.b16 %v1418
    %v1579 = vunpack.c.l.b16 %v1419
    %v1580 = vunpack.c.h.b16 %v1419
    %v1581 = vunpack.c.l.b16 %v1420
    %v1582 = vunpack.c.h.b16 %v1420
    %v1583 = vunpack.c.l.b16 %v1421
    %v1584 = vunpack.c.h.b16 %v1421
    %v1585 = vunpack.c.l.b16 %v1422
    %v1586 = vunpack.c.h.b16 %v1422
    %v1587 = vunpack.c.l.b16 %v1423
    %v1588 = vunpack.c.h.b16 %v1423
    %v1589 = vunpack.c.l.b16 %v1424
    %v1590 = vunpack.c.h.b16 %v1424
    %v1591 = vunpack.c.l.b16 %v1425
    %v1592 = vunpack.c.h.b16 %v1425
    %v1593 = vunpack.c.l.b16 %v1426
    %v1594 = vunpack.c.h.b16 %v1426
    %v1595 = vunpack.c.l.b16 %v1427
    %v1596 = vunpack.c.h.b16 %v1427
    %v1597 = vunpack.c.l.b16 %v1428
    %v1598 = vunpack.c.h.b16 %v1428
    %v1599 = vunpack.c.l.b16 %v1429
    %v1600 = vunpack.c.h.b16 %v1429
    %v1601 = vunpack.c.l.b16 %v1430
    %v1602 = vunpack.c.h.b16 %v1430
    %v1603 = vunpack.c.l.b16 %v1431
    %v1604 = vunpack.c.h.b16 %v1431
    %v1605 = vunpack.c.l.b16 %v1432
    %v1606 = vunpack.c.h.b16 %v1432
    %v1607 = vunpack.c.l.b16 %v1433
    %v1608 = vunpack.c.h.b16 %v1433
    %v1609 = vunpack.c.l.b16 %v1434
    %v1610 = vunpack.c.h.b16 %v1434
    %v1611 = vunpack.c.l.b16 %v1435
    %v1612 = vunpack.c.h.b16 %v1435
    %v1613 = vunpack.c.l.b16 %v1436
    %v1614 = vunpack.c.h.b16 %v1436
    %v1615 = vunpack.c.l.b16 %v1437
    %v1616 = vunpack.c.h.b16 %v1437
    %v1617 = vunpack.c.l.b16 %v1438
    %v1618 = vunpack.c.h.b16 %v1438
    %v1619 = vunpack.c.l.b16 %v1439
    %v1620 = vunpack.c.h.b16 %v1439
    %v1621 = vunpack.c.l.b16 %v1440
    %v1622 = vunpack.c.h.b16 %v1440
    %v1623 = vunpack.c.l.b16 %v1441
    %v1624 = vunpack.c.h.b16 %v1441
    %v1625 = vunpack.c.l.b16 %v1442
    %v1626 = vunpack.c.h.b16 %v1442
    %v1627 = vunpack.c.l.b16 %v1443
    %v1628 = vunpack.c.h.b16 %v1443
    %v1629 = vunpack.c.l.b16 %v1444
    %v1630 = vunpack.c.h.b16 %v1444
    %v1631 = vunpack.c.l.b16 %v1445
    %v1632 = vunpack.c.h.b16 %v1445
    %v1633 = vunpack.c.l.b16 %v1446
    %v1634 = vunpack.c.h.b16 %v1446
    %v1635 = vunpack.c.l.b16 %v1447
    %v1636 = vunpack.c.h.b16 %v1447
    %v1637 = vunpack.c.l.b16 %v1448
    %v1638 = vunpack.c.h.b16 %v1448
    %v1639 = vunpack.c.l.b16 %v1449
    %v1640 = vunpack.c.h.b16 %v1449
    %v1641 = vunpack.c.l.b16 %v1450
    %v1642 = vunpack.c.h.b16 %v1450
    %v1643 = vunpack.c.l.b16 %v1451
    %v1644 = vunpack.c.h.b16 %v1451
    %v1645 = vunpack.c.l.b16 %v1452
    %v1646 = vunpack.c.h.b16 %v1452
    %v1647 = vunpack.c.l.b16 %v1453
    %v1648 = vunpack.c.h.b16 %v1453
    %v1649 = vunpack.c.l.b16 %v1454
    %v1650 = vunpack.c.h.b16 %v1454
    %v1651 = vunpack.c.l.b16 %v1455
    %v1652 = vunpack.c.h.b16 %v1455
    %v1653 = vunpack.c.l.b16 %v1456
    %v1654 = vunpack.c.h.b16 %v1456
    %v1655 = vunpack.c.l.b16 %v1457
    %v1656 = vunpack.c.h.b16 %v1457
    %v1657 = vunpack.c.l.b16 %v1458
    %v1658 = vunpack.c.h.b16 %v1458
    %v1659 = vunpack.c.l.b16 %v1459
    %v1660 = vunpack.c.h.b16 %v1459
    %v1661 = vunpack.c.l.b16 %v1460
    %v1662 = vunpack.c.h.b16 %v1460
    %v1663 = vunpack.c.l.b16 %v1461
    %v1664 = vunpack.c.h.b16 %v1461
    %v1665 = vunpack.c.l.b16 %v1462
    %v1666 = vunpack.c.h.b16 %v1462
    %v1667 = vunpack.c.l.b16 %v1463
    %v1668 = vunpack.c.h.b16 %v1463
    %v1669 = vunpack.c.l.b16 %v1464
    %v1670 = vunpack.c.h.b16 %v1464
    %v1671 = vunpack.c.l.b16 %v1465
    %v1672 = vunpack.c.h.b16 %v1465
    %v1673 = vunpack.c.l.b16 %v1466
    %v1674 = vunpack.c.h.b16 %v1466
    %v1675 = vpack.c.b16 %v1549, %v1547
    %v1676 = vpack.c.b16 %v1550, %v1548
    %v1677 = vpack.c.b16 %v1553, %v1551
    %v1678 = vpack.c.b16 %v1554, %v1552
    %v1679 = vpack.c.b16 %v1557, %v1555
    %v1680 = vpack.c.b16 %v1558, %v1556
    %v1681 = vpack.c.b16 %v1561, %v1559
    %v1682 = vpack.c.b16 %v1562, %v1560
    %v1683 = vpack.c.b16 %v1565, %v1563
    %v1684 = vpack.c.b16 %v1566, %v1564
    %v1685 = vpack.c.b16 %v1569, %v1567
    %v1686 = vpack.c.b16 %v1570, %v1568
    %v1687 = vpack.c.b16 %v1573, %v1571
    %v1688 = vpack.c.b16 %v1574, %v1572
    %v1689 = vpack.c.b16 %v1577, %v1575
    %v1690 = vpack.c.b16 %v1578, %v1576
    %v1691 = vpack.c.b16 %v1581, %v1579
    %v1692 = vpack.c.b16 %v1582, %v1580
    %v1693 = vpack.c.b16 %v1585, %v1583
    %v1694 = vpack.c.b16 %v1586, %v1584
    %v1695 = vpack.c.b16 %v1589, %v1587
    %v1696 = vpack.c.b16 %v1590, %v1588
    %v1697 = vpack.c.b16 %v1593, %v1591
    %v1698 = vpack.c.b16 %v1594, %v1592
    %v1699 = vpack.c.b16 %v1597, %v1595
    %v1700 = vpack.c.b16 %v1598, %v1596
    %v1701 = vpack.c.b16 %v1601, %v1599
    %v1702 = vpack.c.b16 %v1602, %v1600
    %v1703 = vpack.c.b16 %v1605, %v1603
    %v1704 = vpack.c.b16 %v1606, %v1604
    %v1705 = vpack.c.b16 %v1609, %v1607
    %v1706 = vpack.c.b16 %v1610, %v1608
    %v1707 = vpack.c.b16 %v1613, %v1611
    %v1708 = vpack.c.b16 %v1614, %v1612
    %v1709 = vpack.c.b16 %v1617, %v1615
    %v1710 = vpack.c.b16 %v1618, %v1616
    %v1711 = vpack.c.b16 %v1621, %v1619
    %v1712 = vpack.c.b16 %v1622, %v1620
    %v1713 = vpack.c.b16 %v1625, %v1623
    %v1714 = vpack.c.b16 %v1626, %v1624
    %v1715 = vpack.c.b16 %v1629, %v1627
    %v1716 = vpack.c.b16 %v1630, %v1628
    %v1717 = vpack.c.b16 %v1633, %v1631
    %v1718 = vpack.c.b16 %v1634, %v1632
    %v1719 = vpack.c.b16 %v1637, %v1635
    %v1720 = vpack.c.b16 %v1638, %v1636
    %v1721 = vpack.c.b16 %v1641, %v1639
    %v1722 = vpack.c.b16 %v1642, %v1640
    %v1723 = vpack.c.b16 %v1645, %v1643
    %v1724 = vpack.c.b16 %v1646, %v1644
    %v1725 = vpack.c.b16 %v1649, %v1647
    %v1726 = vpack.c.b16 %v1650, %v1648
    %v1727 = vpack.c.b16 %v1653, %v1651
    %v1728 = vpack.c.b16 %v1654, %v1652
    %v1729 = vpack.c.b16 %v1657, %v1655
    %v1730 = vpack.c.b16 %v1658, %v1656
    %v1731 = vpack.c.b16 %v1661, %v1659
    %v1732 = vpack.c.b16 %v1662, %v1660
    %v1733 = vpack.c.b16 %v1665, %v1663
    %v1734 = vpack.c.b16 %v1666, %v1664
    %v1735 = vpack.c.b16 %v1669, %v1667
    %v1736 = vpack.c.b16 %v1670, %v1668
    %v1737 = vpack.c.b16 %v1673, %v1671
    %v1738 = vpack.c.b16 %v1674, %v1672
    %1803 = vmatprep.subr.bf16.mxu0 %v1676
    %1804 = vmatpush1.bf16.msra.mxu0 %v1675
    %1805 = vmatprep.subr.bf16.mxu0 %v1678
    %1806 = vmatpush1.bf16.msra.mxu0 %v1677
    %1807 = vmatprep.subr.bf16.mxu0 %v1680
    %1808 = vmatpush1.bf16.msra.mxu0 %v1679
    %1809 = vmatprep.subr.bf16.mxu0 %v1682
    %1810 = vmatpush1.bf16.msra.mxu0 %v1681
    %1811 = vmatprep.subr.bf16.mxu0 %v1684
    %1812 = vmatpush1.bf16.msra.mxu0 %v1683
    %1813 = vmatprep.subr.bf16.mxu0 %v1686
    %1814 = vmatpush1.bf16.msra.mxu0 %v1685
    %1815 = vmatprep.subr.bf16.mxu0 %v1688
    %1816 = vmatpush1.bf16.msra.mxu0 %v1687
    %1817 = vmatprep.subr.bf16.mxu0 %v1690
    %1818 = vmatpush1.bf16.msra.mxu0 %v1689
    %1819 = vmatprep.subr.bf16.mxu0 %v1692
    %1820 = vmatpush1.bf16.msra.mxu0 %v1691
    %1821 = vmatprep.subr.bf16.mxu0 %v1694
    %1822 = vmatpush1.bf16.msra.mxu0 %v1693
    %1823 = vmatprep.subr.bf16.mxu0 %v1696
    %1824 = vmatpush1.bf16.msra.mxu0 %v1695
    %1825 = vmatprep.subr.bf16.mxu0 %v1698
    %1826 = vmatpush1.bf16.msra.mxu0 %v1697
    %1827 = vmatprep.subr.bf16.mxu0 %v1700
    %1828 = vmatpush1.bf16.msra.mxu0 %v1699
    %1829 = vmatprep.subr.bf16.mxu0 %v1702
    %1830 = vmatpush1.bf16.msra.mxu0 %v1701
    %1831 = vmatprep.subr.bf16.mxu0 %v1704
    %1832 = vmatpush1.bf16.msra.mxu0 %v1703
    %1833 = vmatprep.subr.bf16.mxu0 %v1706
    %1834 = vmatpush1.bf16.msra.mxu0 %v1705
    %1835 = vmatprep.mubr.bf16.mxu0 %v1469
    %1836 = vmatmul.mubr.bf16.gmra.mrb[0].mxu0 %v1468
    %v1837 = vpop.f32.mrb[0].mxu0
    %v1838 = vadd.f32 %v1476, %v1837
    %v1839 = vpop.f32.mrb[0].mxu0
    %v1840 = vadd.f32 %v1480, %v1839
    %v1841 = vpop.f32.mrb[0].mxu0
    %v1842 = vpop.f32.mrb[0].mxu0
    %1843 = vdwg.mxu0
    %1844 = vmatprep.subr.bf16.mxu0 %v1708
    %1845 = vmatpush1.bf16.msra.mxu0 %v1707
    %1846 = vmatprep.subr.bf16.mxu0 %v1710
    %1847 = vmatpush1.bf16.msra.mxu0 %v1709
    %1848 = vmatprep.subr.bf16.mxu0 %v1712
    %1849 = vmatpush1.bf16.msra.mxu0 %v1711
    %1850 = vmatprep.subr.bf16.mxu0 %v1714
    %1851 = vmatpush1.bf16.msra.mxu0 %v1713
    %1852 = vmatprep.subr.bf16.mxu0 %v1716
    %1853 = vmatpush1.bf16.msra.mxu0 %v1715
    %1854 = vmatprep.subr.bf16.mxu0 %v1718
    %1855 = vmatpush1.bf16.msra.mxu0 %v1717
    %1856 = vmatprep.subr.bf16.mxu0 %v1720
    %1857 = vmatpush1.bf16.msra.mxu0 %v1719
    %1858 = vmatprep.subr.bf16.mxu0 %v1722
    %1859 = vmatpush1.bf16.msra.mxu0 %v1721
    %1860 = vmatprep.subr.bf16.mxu0 %v1724
    %1861 = vmatpush1.bf16.msra.mxu0 %v1723
    %1862 = vmatprep.subr.bf16.mxu0 %v1726
    %1863 = vmatpush1.bf16.msra.mxu0 %v1725
    %1864 = vmatprep.subr.bf16.mxu0 %v1728
    %1865 = vmatpush1.bf16.msra.mxu0 %v1727
    %1866 = vmatprep.subr.bf16.mxu0 %v1730
    %1867 = vmatpush1.bf16.msra.mxu0 %v1729
    %1868 = vmatprep.subr.bf16.mxu0 %v1732
    %1869 = vmatpush1.bf16.msra.mxu0 %v1731
    %1870 = vmatprep.subr.bf16.mxu0 %v1734
    %1871 = vmatpush1.bf16.msra.mxu0 %v1733
    %1872 = vmatprep.subr.bf16.mxu0 %v1736
    %1873 = vmatpush1.bf16.msra.mxu0 %v1735
    %1874 = vmatprep.subr.bf16.mxu0 %v1738
    %1875 = vmatpush1.bf16.msra.mxu0 %v1737
    %1876 = vmatprep.mubr.bf16.mxu0 %v1471
    %1877 = vmatmul.mubr.bf16.gmra.mrb[0].mxu0 %v1470
    %v1878 = vpop.f32.mrb[0].mxu0
    %v1879 = vadd.f32 %v1838, %v1878
    %v1880 = vpop.f32.mrb[0].mxu0
    %v1881 = vadd.f32 %v1840, %v1880
    %v1882 = vpop.f32.mrb[0].mxu0
    %v1883 = vpop.f32.mrb[0].mxu0
    %1884 = vdwg.mxu0
    %v1885 = vmax.f32 %v1879, 0.0
    %v1886 = vmax.f32 %v1881, 0.0
    %v1887 = vld [vmem:[#allocation10] sm:$0xf]
    %v1888 = vld [vmem:[#allocation10 + $0x4] sm:$0xf]
    %v1889 = vld [vmem:[#allocation10 + $0x8] sm:$0xf]
    %v1890 = vld [vmem:[#allocation10 + $0xc] sm:$0xf]
    %v1891 = vld [vmem:[#allocation10 + $0x10] sm:$0xf]
    %v1892 = vld [vmem:[#allocation10 + $0x14] sm:$0xf]
    %v1893 = vld [vmem:[#allocation10 + $0x18] sm:$0xf]
    %v1894 = vld [vmem:[#allocation10 + $0x1c] sm:$0xf]
    %v1895 = vld [vmem:[#allocation10 + $0x20] sm:$0xf]
    %v1896 = vld [vmem:[#allocation10 + $0x24] sm:$0xf]
    %v1897 = vld [vmem:[#allocation10 + $0x28] sm:$0xf]
    %v1898 = vld [vmem:[#allocation10 + $0x2c] sm:$0xf]
    %v1899 = vld [vmem:[#allocation10 + $0x30] sm:$0xf]
    %v1900 = vld [vmem:[#allocation10 + $0x34] sm:$0xf]
    %v1901 = vld [vmem:[#allocation10 + $0x38] sm:$0xf]
    %v1902 = vld [vmem:[#allocation10 + $0x3c] sm:$0xf]
    %v1903 = vld [vmem:[#allocation10 + $0x40] sm:$0xf]
    %v1904 = vld [vmem:[#allocation10 + $0x44] sm:$0xf]
    %v1905 = vld [vmem:[#allocation10 + $0x48] sm:$0xf]
    %v1906 = vld [vmem:[#allocation10 + $0x4c] sm:$0xf]
    %v1907 = vld [vmem:[#allocation10 + $0x50] sm:$0xf]
    %v1908 = vld [vmem:[#allocation10 + $0x54] sm:$0xf]
    %v1909 = vld [vmem:[#allocation10 + $0x58] sm:$0xf]
    %v1910 = vld [vmem:[#allocation10 + $0x5c] sm:$0xf]
    %v1911 = vld [vmem:[#allocation10 + $0x60] sm:$0xf]
    %v1912 = vld [vmem:[#allocation10 + $0x64] sm:$0xf]
    %v1913 = vld [vmem:[#allocation10 + $0x68] sm:$0xf]
    %v1914 = vld [vmem:[#allocation10 + $0x6c] sm:$0xf]
    %v1915 = vld [vmem:[#allocation10 + $0x70] sm:$0xf]
    %v1916 = vld [vmem:[#allocation10 + $0x74] sm:$0xf]
    %v1917 = vld [vmem:[#allocation10 + $0x78] sm:$0xf]
    %v1918 = vld [vmem:[#allocation10 + $0x7c] sm:$0xf]
    %v1919 = vld [vmem:[%s8] sm:$0x1]
    %v1920 = vpack.c.bf16 %v1885, %v1885
    %v1921 = vpack.c.bf16 %v1886, %v1886
    %v1923 = vlaneseq
    %v1924 = vshrl.u32 %v1923, 7
    %v1925 = vsub.s32 0, %v1924
    %v1926 = vrot.slane %v1919, %v1925
    %v1960 = vunpack.c.l.b16 %v1887
    %v1961 = vunpack.c.l.b16 %v1888
    %v1962 = vunpack.c.l.b16 %v1889
    %v1963 = vunpack.c.l.b16 %v1890
    %v1964 = vunpack.c.l.b16 %v1891
    %v1965 = vunpack.c.l.b16 %v1892
    %v1966 = vunpack.c.l.b16 %v1893
    %v1967 = vunpack.c.l.b16 %v1894
    %v1968 = vunpack.c.l.b16 %v1895
    %v1969 = vunpack.c.l.b16 %v1896
    %v1970 = vunpack.c.l.b16 %v1897
    %v1971 = vunpack.c.l.b16 %v1898
    %v1972 = vunpack.c.l.b16 %v1899
    %v1973 = vunpack.c.l.b16 %v1900
    %v1974 = vunpack.c.l.b16 %v1901
    %v1975 = vunpack.c.l.b16 %v1902
    %v1976 = vunpack.c.l.b16 %v1903
    %v1977 = vunpack.c.l.b16 %v1904
    %v1978 = vunpack.c.l.b16 %v1905
    %v1979 = vunpack.c.l.b16 %v1906
    %v1980 = vunpack.c.l.b16 %v1907
    %v1981 = vunpack.c.l.b16 %v1908
    %v1982 = vunpack.c.l.b16 %v1909
    %v1983 = vunpack.c.l.b16 %v1910
    %v1984 = vunpack.c.l.b16 %v1911
    %v1985 = vunpack.c.l.b16 %v1912
    %v1986 = vunpack.c.l.b16 %v1913
    %v1987 = vunpack.c.l.b16 %v1914
    %v1988 = vunpack.c.l.b16 %v1915
    %v1989 = vunpack.c.l.b16 %v1916
    %v1990 = vunpack.c.l.b16 %v1917
    %v1991 = vunpack.c.l.b16 %v1918
    %v1992 = vpack.c.b16 %v1961, %v1960
    %v1993 = vpack.c.b16 %v1963, %v1962
    %v1994 = vpack.c.b16 %v1965, %v1964
    %v1995 = vpack.c.b16 %v1967, %v1966
    %v1996 = vpack.c.b16 %v1969, %v1968
    %v1997 = vpack.c.b16 %v1971, %v1970
    %v1998 = vpack.c.b16 %v1973, %v1972
    %v1999 = vpack.c.b16 %v1975, %v1974
    %v2000 = vpack.c.b16 %v1977, %v1976
    %v2001 = vpack.c.b16 %v1979, %v1978
    %v2002 = vpack.c.b16 %v1981, %v1980
    %v2003 = vpack.c.b16 %v1983, %v1982
    %v2004 = vpack.c.b16 %v1985, %v1984
    %v2005 = vpack.c.b16 %v1987, %v1986
    %v2006 = vpack.c.b16 %v1989, %v1988
    %v2007 = vpack.c.b16 %v1991, %v1990
    %2024 = vmatprep.subr.bf16.mxu0 0
    %2025 = vmatpush1.bf16.msra.mxu0 %v1992
    %2026 = vmatprep.subr.bf16.mxu0 0
    %2027 = vmatpush1.bf16.msra.mxu0 %v1993
    %2028 = vmatprep.subr.bf16.mxu0 0
    %2029 = vmatpush1.bf16.msra.mxu0 %v1994
    %2030 = vmatprep.subr.bf16.mxu0 0
    %2031 = vmatpush1.bf16.msra.mxu0 %v1995
    %2032 = vmatprep.subr.bf16.mxu0 0
    %2033 = vmatpush1.bf16.msra.mxu0 %v1996
    %2034 = vmatprep.subr.bf16.mxu0 0
    %2035 = vmatpush1.bf16.msra.mxu0 %v1997
    %2036 = vmatprep.subr.bf16.mxu0 0
    %2037 = vmatpush1.bf16.msra.mxu0 %v1998
    %2038 = vmatprep.subr.bf16.mxu0 0
    %2039 = vmatpush1.bf16.msra.mxu0 %v1999
    %2040 = vmatprep.subr.bf16.mxu0 0
    %2041 = vmatpush1.bf16.msra.mxu0 %v2000
    %2042 = vmatprep.subr.bf16.mxu0 0
    %2043 = vmatpush1.bf16.msra.mxu0 %v2001
    %2044 = vmatprep.subr.bf16.mxu0 0
    %2045 = vmatpush1.bf16.msra.mxu0 %v2002
    %2046 = vmatprep.subr.bf16.mxu0 0
    %2047 = vmatpush1.bf16.msra.mxu0 %v2003
    %2048 = vmatprep.subr.bf16.mxu0 0
    %2049 = vmatpush1.bf16.msra.mxu0 %v2004
    %2050 = vmatprep.subr.bf16.mxu0 0
    %2051 = vmatpush1.bf16.msra.mxu0 %v2005
    %2052 = vmatprep.subr.bf16.mxu0 0
    %2053 = vmatpush1.bf16.msra.mxu0 %v2006
    %2054 = vmatprep.subr.bf16.mxu0 0
    %2055 = vmatpush1.bf16.msra.mxu0 %v2007
    %2056 = vmatprep.mubr.bf16.mxu0 %v1921
    %2057 = vmatmul.mubr.bf16.gmra.mrb[0].mxu0 %v1920
    %v2058 = vpop.f32.mrb[0].mxu0
    %v2059 = vadd.f32 %v1926, %v2058
    %v2060 = vpop.f32.mrb[0].mxu0
    %v2061 = vpop.f32.mrb[0].mxu0
    %v2062 = vpop.f32.mrb[0].mxu0
    %2063 = vdwg.mxu0
    %v2064 = vmax.f32 %v2059, 0.0
    %v2065 = vld [vmem:[#allocation11] sm:$0xf]
    %v2066 = vld [vmem:[#allocation11 + $0x4] sm:$0xf]
    %v2067 = vld [vmem:[#allocation11 + $0x8] sm:$0xf]
    %v2068 = vld [vmem:[#allocation11 + $0xc] sm:$0xf]
    %v2069 = vld [vmem:[#allocation11 + $0x10] sm:$0xf]
    %v2070 = vld [vmem:[#allocation11 + $0x14] sm:$0xf]
    %v2071 = vld [vmem:[#allocation11 + $0x18] sm:$0xf]
    %v2072 = vld [vmem:[#allocation11 + $0x1c] sm:$0xf]
    %v2073 = vld [vmem:[#allocation11 + $0x20] sm:$0xf]
    %v2074 = vld [vmem:[#allocation11 + $0x24] sm:$0xf]
    %v2075 = vld [vmem:[#allocation11 + $0x28] sm:$0xf]
    %v2076 = vld [vmem:[#allocation11 + $0x2c] sm:$0xf]
    %v2077 = vld [vmem:[#allocation11 + $0x30] sm:$0xf]
    %v2078 = vld [vmem:[#allocation11 + $0x34] sm:$0xf]
    %v2079 = vld [vmem:[#allocation11 + $0x38] sm:$0xf]
    %v2080 = vld [vmem:[#allocation11 + $0x3c] sm:$0xf]
    %v2081 = vld [vmem:[%s10] sm:$0x1]
    %v2082 = vpack.c.bf16 %v2064, %v2064
    %v2084 = vlaneseq
    %v2085 = vshrl.u32 %v2084, 7
    %v2086 = vsub.s32 0, %v2085
    %v2087 = vrot.slane %v2081, %v2086
    %v2105 = vunpack.c.l.b16 %v2065
    %v2106 = vunpack.c.l.b16 %v2066
    %v2107 = vunpack.c.l.b16 %v2067
    %v2108 = vunpack.c.l.b16 %v2068
    %v2109 = vunpack.c.l.b16 %v2069
    %v2110 = vunpack.c.l.b16 %v2070
    %v2111 = vunpack.c.l.b16 %v2071
    %v2112 = vunpack.c.l.b16 %v2072
    %v2113 = vunpack.c.l.b16 %v2073
    %v2114 = vunpack.c.l.b16 %v2074
    %v2115 = vunpack.c.l.b16 %v2075
    %v2116 = vunpack.c.l.b16 %v2076
    %v2117 = vunpack.c.l.b16 %v2077
    %v2118 = vunpack.c.l.b16 %v2078
    %v2119 = vunpack.c.l.b16 %v2079
    %v2120 = vunpack.c.l.b16 %v2080
    %v2121 = vpack.c.b16 %v2106, %v2105
    %v2122 = vpack.c.b16 %v2108, %v2107
    %v2123 = vpack.c.b16 %v2110, %v2109
    %v2124 = vpack.c.b16 %v2112, %v2111
    %v2125 = vpack.c.b16 %v2114, %v2113
    %v2126 = vpack.c.b16 %v2116, %v2115
    %v2127 = vpack.c.b16 %v2118, %v2117
    %v2128 = vpack.c.b16 %v2120, %v2119
    %2137 = vmatprep.subr.bf16.mxu0 0
    %2138 = vmatpush1.bf16.msra.mxu0 %v2121
    %2139 = vmatprep.subr.bf16.mxu0 0
    %2140 = vmatpush1.bf16.msra.mxu0 %v2122
    %2141 = vmatprep.subr.bf16.mxu0 0
    %2142 = vmatpush1.bf16.msra.mxu0 %v2123
    %2143 = vmatprep.subr.bf16.mxu0 0
    %2144 = vmatpush1.bf16.msra.mxu0 %v2124
    %2145 = vmatprep.subr.bf16.mxu0 0
    %2146 = vmatpush1.bf16.msra.mxu0 %v2125
    %2147 = vmatprep.subr.bf16.mxu0 0
    %2148 = vmatpush1.bf16.msra.mxu0 %v2126
    %2149 = vmatprep.subr.bf16.mxu0 0
    %2150 = vmatpush1.bf16.msra.mxu0 %v2127
    %2151 = vmatprep.subr.bf16.mxu0 0
    %2152 = vmatpush1.bf16.msra.mxu0 %v2128
    %2153 = vmatprep.subr.bf16.mxu0 0
    %2154 = vmatpush1.bf16.msra.mxu0 0
    %2155 = vmatprep.subr.bf16.mxu0 0
    %2156 = vmatpush1.bf16.msra.mxu0 0
    %2157 = vmatprep.subr.bf16.mxu0 0
    %2158 = vmatpush1.bf16.msra.mxu0 0
    %2159 = vmatprep.subr.bf16.mxu0 0
    %2160 = vmatpush1.bf16.msra.mxu0 0
    %2161 = vmatprep.subr.bf16.mxu0 0
    %2162 = vmatpush1.bf16.msra.mxu0 0
    %2163 = vmatprep.subr.bf16.mxu0 0
    %2164 = vmatpush1.bf16.msra.mxu0 0
    %2165 = vmatprep.subr.bf16.mxu0 0
    %2166 = vmatpush1.bf16.msra.mxu0 0
    %2167 = vmatprep.subr.bf16.mxu0 0
    %2168 = vmatpush1.bf16.msra.mxu0 0
    %2169 = vmatprep.mubr.bf16.mxu0 0
    %2170 = vmatmul.mubr.bf16.gmra.mrb[0].mxu0 %v2082
    %v2171 = vpop.f32.mrb[0].mxu0
    %v2172 = vadd.f32 %v2087, %v2171
    %v2173 = vpop.f32.mrb[0].mxu0
    %v2174 = vpop.f32.mrb[0].mxu0
    %v2175 = vpop.f32.mrb[0].mxu0
    %2176 = vdwg.mxu0
    %v2177 = vmax.f32 %v2172, 0.0
    %v2178 = vld [vmem:[#allocation13] sm:$0xf]
    %v2179 = vld [vmem:[#allocation13 + $0x4] sm:$0xf]
    %v2180 = vld [vmem:[#allocation13 + $0x8] sm:$0xf]
    %v2181 = vld [vmem:[#allocation13 + $0xc] sm:$0xf]
    %v2182 = vld [vmem:[#allocation13 + $0x10] sm:$0xf]
    %v2183 = vld [vmem:[#allocation13 + $0x14] sm:$0xf]
    %v2184 = vld [vmem:[#allocation13 + $0x18] sm:$0xf]
    %v2185 = vld [vmem:[#allocation13 + $0x1c] sm:$0xf]
    %v2186 = vld [vmem:[#allocation13 + $0x20] sm:$0xf]
    %v2187 = vld [vmem:[#allocation13 + $0x24] sm:$0xf]
    %v2188 = vld [vmem:[#allocation13 + $0x28] sm:$0xf]
    %v2189 = vld [vmem:[#allocation13 + $0x2c] sm:$0xf]
    %v2190 = vld [vmem:[#allocation13 + $0x30] sm:$0xf]
    %v2191 = vld [vmem:[#allocation13 + $0x34] sm:$0xf]
    %v2192 = vld [vmem:[#allocation13 + $0x38] sm:$0xf]
    %v2193 = vld [vmem:[#allocation13 + $0x3c] sm:$0xf]
    %v2194 = vld [vmem:[%s12] sm:$0x1]
    %v2195 = vpack.c.bf16 %v2177, %v2177
    %v2197 = vlaneseq
    %v2198 = vshrl.u32 %v2197, 7
    %v2199 = vsub.s32 0, %v2198
    %v2200 = vrot.slane %v2194, %v2199
    %v2218 = vunpack.c.l.b16 %v2178
    %v2219 = vunpack.c.l.b16 %v2179
    %v2220 = vunpack.c.l.b16 %v2180
    %v2221 = vunpack.c.l.b16 %v2181
    %v2222 = vunpack.c.l.b16 %v2182
    %v2223 = vunpack.c.l.b16 %v2183
    %v2224 = vunpack.c.l.b16 %v2184
    %v2225 = vunpack.c.l.b16 %v2185
    %v2226 = vunpack.c.l.b16 %v2186
    %v2227 = vunpack.c.l.b16 %v2187
    %v2228 = vunpack.c.l.b16 %v2188
    %v2229 = vunpack.c.l.b16 %v2189
    %v2230 = vunpack.c.l.b16 %v2190
    %v2231 = vunpack.c.l.b16 %v2191
    %v2232 = vunpack.c.l.b16 %v2192
    %v2233 = vunpack.c.l.b16 %v2193
    %v2234 = vpack.c.b16 %v2219, %v2218
    %v2235 = vpack.c.b16 %v2221, %v2220
    %v2236 = vpack.c.b16 %v2223, %v2222
    %v2237 = vpack.c.b16 %v2225, %v2224
    %v2238 = vpack.c.b16 %v2227, %v2226
    %v2239 = vpack.c.b16 %v2229, %v2228
    %v2240 = vpack.c.b16 %v2231, %v2230
    %v2241 = vpack.c.b16 %v2233, %v2232
    %2250 = vmatprep.subr.bf16.mxu0 0
    %2251 = vmatpush1.bf16.msra.mxu0 %v2234
    %2252 = vmatprep.subr.bf16.mxu0 0
    %2253 = vmatpush1.bf16.msra.mxu0 %v2235
    %2254 = vmatprep.subr.bf16.mxu0 0
    %2255 = vmatpush1.bf16.msra.mxu0 %v2236
    %2256 = vmatprep.subr.bf16.mxu0 0
    %2257 = vmatpush1.bf16.msra.mxu0 %v2237
    %2258 = vmatprep.subr.bf16.mxu0 0
    %2259 = vmatpush1.bf16.msra.mxu0 %v2238
    %2260 = vmatprep.subr.bf16.mxu0 0
    %2261 = vmatpush1.bf16.msra.mxu0 %v2239
    %2262 = vmatprep.subr.bf16.mxu0 0
    %2263 = vmatpush1.bf16.msra.mxu0 %v2240
    %2264 = vmatprep.subr.bf16.mxu0 0
    %2265 = vmatpush1.bf16.msra.mxu0 %v2241
    %2266 = vmatprep.subr.bf16.mxu0 0
    %2267 = vmatpush1.bf16.msra.mxu0 0
    %2268 = vmatprep.subr.bf16.mxu0 0
    %2269 = vmatpush1.bf16.msra.mxu0 0
    %2270 = vmatprep.subr.bf16.mxu0 0
    %2271 = vmatpush1.bf16.msra.mxu0 0
    %2272 = vmatprep.subr.bf16.mxu0 0
    %2273 = vmatpush1.bf16.msra.mxu0 0
    %2274 = vmatprep.subr.bf16.mxu0 0
    %2275 = vmatpush1.bf16.msra.mxu0 0
    %2276 = vmatprep.subr.bf16.mxu0 0
    %2277 = vmatpush1.bf16.msra.mxu0 0
    %2278 = vmatprep.subr.bf16.mxu0 0
    %2279 = vmatpush1.bf16.msra.mxu0 0
    %2280 = vmatprep.subr.bf16.mxu0 0
    %2281 = vmatpush1.bf16.msra.mxu0 0
    %2282 = vmatprep.mubr.bf16.mxu0 0
    %2283 = vmatmul.mubr.bf16.gmra.mrb[0].mxu0 %v2195
    %v2284 = vpop.f32.mrb[0].mxu0
    %v2285 = vadd.f32 %v2200, %v2284
    %v2286 = vpop.f32.mrb[0].mxu0
    %v2287 = vpop.f32.mrb[0].mxu0
    %v2288 = vpop.f32.mrb[0].mxu0
    %2289 = vdwg.mxu0
    %2290 = vst [vmem:[#allocation14] sm:$0xff] %v2285
    // Predicated region
    $region82: #{tpu_custom_call.1} parent=1 // pred_check
      _
    $region83: #{tpu_custom_call.1} parent=1 // pred_check_branch
      %2292 = sbr.rel (0) target = $region85
    $region84: #{tpu_custom_call.1} parent=1 // pred_region
      %s2294 = ssub.s32 128, 128
      %2295 = vsyncadd [#allocation4], %s2294
      %s2297 = sshll.u32 [#allocation14], 4
      %s2298 = int_to_ptr.vmem [resolvable:$true] %s2297
      %2300 = dma.vmem_to_hbm [thread:$0]  %s2298, 128, %s13, [#allocation4]
    $region85: #{tpu_custom_call.1} parent=1 // pred_fallthru
      _
    // Predicated region
    $region86: #{tpu_custom_call.1} parent=1 // pred_check
      _
    $region87: #{tpu_custom_call.1} parent=1 // pred_check_branch
      %2302 = sbr.rel (0) target = $region89
    $region88: #{tpu_custom_call.1} parent=1 // pred_region
      %2303 = dma.done [#allocation4], 128
    $region89: #{tpu_custom_call.1} parent=1 // pred_fallthru
      _
    %2304 = vsyncpa [#allocation3], 1
    %2305 = vsyncpa [#allocation6], 1
    %2306 = vsyncpa [#allocation9], 1
    %2307 = vsyncpa [#allocation12], 1
    %2308 = vsyncpa [#allocation4], 1

</llo_original>
